<compile_context>
chip_gen: v7x
topology: tpu7x:2x2x1
jax: 0.10.0
libtpu: 0.0.40
codegen_flags: <defaults>
</compile_context>

<pallas_src>
import jax
import jax.numpy as jnp
import numpy as np
from jax.experimental import pallas as pl
from jax.experimental.pallas import tpu as pltpu


# ----------------------------- Pallas kernel --------------------------------
def mtl_asp_kernel(emb_ref,                     # (T*Bp, D)  time-major, batch padded
                   wih_f_ref, whh_f_ref, b_f_ref,   # fwd dirs:  (D,8H), (2H,8H), (1,8H)
                   wih_b_ref, whh_b_ref, b_b_ref,   # bwd dirs:  (D,8H), (2H,8H), (1,8H)
                   fcw_ref, fcb_ref,            # (4H, out), (1, out)
                   target_ref, share_ref,       # outputs: (Bp, out), (Bp, 2H)
                   xproj_f_ref, xproj_b_ref,    # scratch: (T*Bp, 8H) x 2
                   fuse_ref):                   # scratch: (Bp, 4H)
    TB, _ = emb_ref.shape
    Bp = target_ref.shape[0]
    T = TB // Bp
    G = wih_f_ref.shape[1]        # 4 gates * 2 chains * H
    H2 = G // 4                   # 2 chains * H  (lanes: [share(H), private(H)])
    H = H2 // 2

    # ---- Hoisted input projection: one matmul per direction covers every
    #      timestep / gate / chain, with bias folded in (no per-step bias adds).
    emb = emb_ref[...]
    xproj_f_ref[...] = (jnp.dot(emb, wih_f_ref[...],
                                preferred_element_type=jnp.float32) + b_f_ref[...])
    xproj_b_ref[...] = (jnp.dot(emb, wih_b_ref[...],
                                preferred_element_type=jnp.float32) + b_b_ref[...])

    zeros = jnp.zeros((Bp, H2), jnp.float32)
    neg_inf = jnp.full((Bp, H2), -jnp.inf, jnp.float32)

    def lstm_update(pre, c, p):
        # gate-major lanes: [i | f | g | o], each of width 2H (both chains).
        i = jax.nn.sigmoid(pre[:, 0 * H2:1 * H2])
        f = jax.nn.sigmoid(pre[:, 1 * H2:2 * H2])
        g = jnp.tanh(pre[:, 2 * H2:3 * H2])
        o = jax.nn.sigmoid(pre[:, 3 * H2:4 * H2])
        c_new = f * c + i * g
        h_new = o * jnp.tanh(c_new)
        return h_new, c_new, jnp.maximum(p, h_new)

    def time_rows(t):
        r = t * Bp
        if isinstance(t, (int, np.integer)):
            return r                            # static (unrolled path)
        return pl.multiple_of(r, Bp)            # dynamic, sublane-aligned

    def step(t, carry):
        hF, cF, pF, hB, cB, pB = carry
        xF = xproj_f_ref[pl.ds(time_rows(t), Bp), :]            # (Bp, 8H)
        xB = xproj_b_ref[pl.ds(time_rows(T - 1 - t), Bp), :]    # (Bp, 8H)
        # Fused block-diagonal hidden projection: both chains, all 4 gates at once.
        # W_hh is read from VMEM at the dot site (not held across the loop in vregs).
        preF = xF + jnp.dot(hF, whh_f_ref[...], preferred_element_type=jnp.float32)
        preB = xB + jnp.dot(hB, whh_b_ref[...], preferred_element_type=jnp.float32)
        hF, cF, pF = lstm_update(preF, cF, pF)
        hB, cB, pB = lstm_update(preB, cB, pB)
        return hF, cF, pF, hB, cB, pB

    carry = (zeros, zeros, neg_inf, zeros, zeros, neg_inf)
    if T <= 32:
        # Full unroll for short fixed T: static slices + cross-step scheduling.
        for t in range(T):
            carry = step(t, carry)
    else:
        carry = jax.lax.fori_loop(0, T, step, carry)
    _, _, pF, _, _, pB = carry

    # Pooled representations, assembled via lane-slice writes (no concat):
    #   share = [share_fwd, share_bwd], private = [priv_fwd, priv_bwd]
    share_ref[:, 0:H] = pF[:, 0:H]
    share_ref[:, H:2 * H] = pB[:, 0:H]
    fuse_ref[:, 0:H] = pF[:, 0:H]
    fuse_ref[:, H:2 * H] = pB[:, 0:H]
    fuse_ref[:, 2 * H:3 * H] = pF[:, H:2 * H]
    fuse_ref[:, 3 * H:4 * H] = pB[:, H:2 * H]

    target_ref[...] = (jnp.dot(fuse_ref[...], fcw_ref[...],
                               preferred_element_type=jnp.float32) + fcb_ref[...])


# --------------------------- parameter packing ------------------------------
def init_lstm_params(key, D, H):
    """Raw torch-style bidirectional LSTM params:
    W_ih (2,4H,D), W_hh (2,4H,H), bias b_ih+b_hh (2,4H). Gate order (i,f,g,o)."""
    ks = jax.random.split(key, 4)
    wih = 0.1 * jax.random.normal(ks[0], (2, 4 * H, D), jnp.float32)
    whh = 0.1 * jax.random.normal(ks[1], (2, 4 * H, H), jnp.float32)
    bih = 0.1 * jax.random.normal(ks[2], (2, 4 * H), jnp.float32)
    bhh = 0.1 * jax.random.normal(ks[3], (2, 4 * H), jnp.float32)
    return wih, whh, bih + bhh


def pack_direction(chains, d):
    """Pack n independent LSTMs (chains) of one direction into fused, lane-dense
    weights. Column layout: col = gate*(n*H) + chain*H + j, gate order (i,f,g,o).
      W_ih_packed : (D, 4nH)   — shared input x for all chains
      W_hh_packed : (nH, 4nH)  — block-diagonal across chains
      bias_packed : (1, 4nH)   — b_ih + b_hh folded
    """
    n = len(chains)
    H = chains[0][1].shape[-1]
    wih_cols, b_cols = [], []
    whh_bd = jnp.zeros((n * H, 4 * n * H), jnp.float32)
    for g in range(4):
        for c in range(n):
            wih_c, whh_c, b_c = chains[c]
            wih_cols.append(wih_c[d, g * H:(g + 1) * H, :].T)      # (D, H)
            b_cols.append(b_c[d, g * H:(g + 1) * H])               # (H,)
            col0 = g * n * H + c * H
            whh_bd = whh_bd.at[c * H:(c + 1) * H, col0:col0 + H].set(
                whh_c[d, g * H:(g + 1) * H, :].T)
    return (jnp.concatenate(wih_cols, axis=1),
            whh_bd,
            jnp.concatenate(b_cols)[None, :])


# ------------------------------ forward wrapper ------------------------------
def generate_forward(params, tokens, task_id):
    emb = params["embedding"][tokens]              # (B, T, D) embedding gather (glue)
    B, T, D = emb.shape
    sh = params["share"]
    # private_layer = ModuleList([module] * task_num): every entry is the SAME
    # module; task_id selection is glue.
    pr = tuple(p[task_id] for p in params["private"])
    H = sh[1].shape[-1]
    out_size = params["fc_target_w"].shape[-1]

    # Fuse (share, private) chains per direction: chain 0 = share, chain 1 = private.
    wih_f, whh_f, b_f = pack_direction([sh, pr], 0)   # forward direction
    wih_b, whh_b, b_b = pack_direction([sh, pr], 1)   # backward direction

    # Pad batch to a sublane multiple so per-step tiles are (8, lanes) aligned.
    Bp = ((B + 7) // 8) * 8
    emb_tbd = jnp.transpose(emb, (1, 0, 2))                       # (T, B, D)
    emb_tbd = jnp.pad(emb_tbd, ((0, 0), (0, Bp - B), (0, 0)))     # (T, Bp, D)
    emb2d = emb_tbd.reshape(T * Bp, D)                            # time-major rows

    kernel_fn = pl.pallas_call(
        mtl_asp_kernel,
        out_shape=(jax.ShapeDtypeStruct((Bp, out_size), jnp.float32),
                   jax.ShapeDtypeStruct((Bp, 2 * H), jnp.float32)),
        in_specs=[pl.BlockSpec(memory_space=pltpu.MemorySpace.VMEM)] * 9,
        out_specs=(pl.BlockSpec(memory_space=pltpu.MemorySpace.VMEM),
                   pl.BlockSpec(memory_space=pltpu.MemorySpace.VMEM)),
        scratch_shapes=[
            pltpu.VMEM((T * Bp, 8 * H), jnp.float32),   # fwd-dirs input projection
            pltpu.VMEM((T * Bp, 8 * H), jnp.float32),   # bwd-dirs input projection
            pltpu.VMEM((Bp, 4 * H), jnp.float32),       # fusion (share | private)
        ],
    )
    target_p, share_p = kernel_fn(emb2d, wih_f, whh_f, b_f, wih_b, whh_b, b_b,
                                  params["fc_target_w"], params["fc_target_b"])
    # Dropout is identity at inference; strip batch padding.
    return [target_p[:B], None, share_p[:B]]


# ---------------- pure-JAX reference (for correctness check) ----------------
def bilstm_maxpool_ref(emb, wih, whh, b):
    B, T, _ = emb.shape
    H = whh.shape[-1]

    def run(d, reverse):
        h = jnp.zeros((B, H), jnp.float32)
        c = jnp.zeros((B, H), jnp.float32)
        ts = range(T - 1, -1, -1) if reverse else range(T)
        hs = []
        for t in ts:
            x = emb[:, t, :]
            pre = x @ wih[d].T + h @ whh[d].T + b[d][None, :]
            i = jax.nn.sigmoid(pre[:, 0:H])
            f = jax.nn.sigmoid(pre[:, H:2 * H])
            g = jnp.tanh(pre[:, 2 * H:3 * H])
            o = jax.nn.sigmoid(pre[:, 3 * H:4 * H])
            c = f * c + i * g
            h = o * jnp.tanh(c)
            hs.append(h)
        return jnp.max(jnp.stack(hs, axis=1), axis=1)

    return jnp.concatenate([run(0, False), run(1, True)], axis=-1)


def generate_forward_ref(params, tokens, task_id):
    emb = params["embedding"][tokens]
    share = bilstm_maxpool_ref(emb, *params["share"])
    pr = tuple(p[task_id] for p in params["private"])
    priv = bilstm_maxpool_ref(emb, *pr)
    fusion = jnp.concatenate([share, priv], axis=-1)
    target = fusion @ params["fc_target_w"] + params["fc_target_b"]
    return [target, None, share]


if __name__ == "__main__":
    # Small synthetic config: glove_dim=32, enc_hid_size=16, rnn_layers=1,
    # bidirectional=True, output_size=8, task_num=2, vocab_size=50, seq=8, batch=2.
    B, T, D, H = 2, 8, 32, 16
    vocab_size, out_size, task_num = 50, 8, 2

    root = jax.random.PRNGKey(0)
    k_emb, k_sh, k_pr, k_fc, k_tok = jax.random.split(root, 5)

    emb_table = jax.random.normal(k_emb, (vocab_size, D), jnp.float32)
    sh_params = init_lstm_params(k_sh, D, H)
    pr_single = init_lstm_params(k_pr, D, H)
    private = tuple(jnp.stack([p] * task_num) for p in pr_single)  # shared across tasks

    fc_w_torch = 0.1 * jax.random.normal(k_fc, (out_size, 4 * H), jnp.float32)
    fc_b_torch = 0.1 * jax.random.normal(jax.random.fold_in(k_fc, 1),
                                         (out_size,), jnp.float32)

    params = {
        "embedding": emb_table,
        "share": sh_params,
        "private": private,
        "fc_target_w": fc_w_torch.T,               # (4H, out)
        "fc_target_b": fc_b_torch.reshape(1, out_size),
    }

    tokens = jax.random.randint(k_tok, (B, T), 0, vocab_size, dtype=jnp.int32)
    task_id = 1

    target, _, share = generate_forward(params, tokens, task_id)
    target = jax.block_until_ready(target)
    share = jax.block_until_ready(share)

    target_r, _, share_r = generate_forward_ref(params, tokens, task_id)
    np.testing.assert_allclose(np.asarray(share), np.asarray(share_r),
                               rtol=2e-3, atol=2e-3)
    np.testing.assert_allclose(np.asarray(target), np.asarray(target_r),
                               rtol=2e-3, atol=2e-3)

    assert target.shape == (B, out_size) and share.shape == (B, 2 * H)
    print("KERNEL_OK")
</pallas_src>

<mosaic_0001>
module attributes {stable_mosaic.version = 11 : i64} {
  func.func @mtl_asp_kernel(%arg0: memref<64x32xf32, #tpu.memory_space<vmem>>, %arg1: memref<32x128xf32, #tpu.memory_space<vmem>>, %arg2: memref<32x128xf32, #tpu.memory_space<vmem>>, %arg3: memref<1x128xf32, #tpu.memory_space<vmem>>, %arg4: memref<32x128xf32, #tpu.memory_space<vmem>>, %arg5: memref<32x128xf32, #tpu.memory_space<vmem>>, %arg6: memref<1x128xf32, #tpu.memory_space<vmem>>, %arg7: memref<64x8xf32, #tpu.memory_space<vmem>>, %arg8: memref<1x8xf32, #tpu.memory_space<vmem>>, %arg9: memref<8x8xf32, #tpu.memory_space<vmem>>, %arg10: memref<8x32xf32, #tpu.memory_space<vmem>>, %arg11: memref<64x128xf32, #tpu.memory_space<vmem>>, %arg12: memref<64x128xf32, #tpu.memory_space<vmem>>, %arg13: memref<8x64xf32, #tpu.memory_space<vmem>>) attributes {dimension_semantics = [], scalar_prefetch = 0 : i64, scratch_operands = 3 : i64, tpu.core_type = #tpu.core_type<tc>} {
    %c0 = arith.constant 0 : index
    %c0_0 = arith.constant 0 : index
    %0 = vector.load %arg0[%c0, %c0_0] : memref<64x32xf32, #tpu.memory_space<vmem>>, vector<64x32xf32>
    %c0_1 = arith.constant 0 : index
    %c0_2 = arith.constant 0 : index
    %1 = vector.load %arg1[%c0_1, %c0_2] : memref<32x128xf32, #tpu.memory_space<vmem>>, vector<32x128xf32>
    %cst = arith.constant dense<0.000000e+00> : vector<64x128xf32>
    %2 = tpu.matmul %0, %1, %cst {dimension_numbers = #tpu.dot_dimension_numbers<[1], [0], [0], [1], [0, 0, 1, 1], [], []>} : vector<64x32xf32>, vector<32x128xf32>, vector<64x128xf32> -> vector<64x128xf32>
    %c0_3 = arith.constant 0 : index
    %c0_4 = arith.constant 0 : index
    %3 = vector.load %arg3[%c0_3, %c0_4] : memref<1x128xf32, #tpu.memory_space<vmem>>, vector<1x128xf32>
    %4 = vector.broadcast %3 : vector<1x128xf32> to vector<64x128xf32>
    %5 = arith.addf %2, %4 : vector<64x128xf32>
    %c0_5 = arith.constant 0 : index
    %c0_6 = arith.constant 0 : index
    %6 = vector.load %arg11[%c0_5, %c0_6] : memref<64x128xf32, #tpu.memory_space<vmem>>, vector<64x128xf32>
    tpu.vector_store %arg11[%c0_5, %c0_6], %5 {strides = array<i32>} : memref<64x128xf32, #tpu.memory_space<vmem>>, vector<64x128xf32>,
    %c0_7 = arith.constant 0 : index
    %c0_8 = arith.constant 0 : index
    %7 = vector.load %arg4[%c0_7, %c0_8] : memref<32x128xf32, #tpu.memory_space<vmem>>, vector<32x128xf32>
    %cst_9 = arith.constant dense<0.000000e+00> : vector<64x128xf32>
    %8 = tpu.matmul %0, %7, %cst_9 {dimension_numbers = #tpu.dot_dimension_numbers<[1], [0], [0], [1], [0, 0, 1, 1], [], []>} : vector<64x32xf32>, vector<32x128xf32>, vector<64x128xf32> -> vector<64x128xf32>
    %c0_10 = arith.constant 0 : index
    %c0_11 = arith.constant 0 : index
    %9 = vector.load %arg6[%c0_10, %c0_11] : memref<1x128xf32, #tpu.memory_space<vmem>>, vector<1x128xf32>
    %10 = vector.broadcast %9 : vector<1x128xf32> to vector<64x128xf32>
    %11 = arith.addf %8, %10 : vector<64x128xf32>
    %c0_12 = arith.constant 0 : index
    %c0_13 = arith.constant 0 : index
    %12 = vector.load %arg12[%c0_12, %c0_13] : memref<64x128xf32, #tpu.memory_space<vmem>>, vector<64x128xf32>
    tpu.vector_store %arg12[%c0_12, %c0_13], %11 {strides = array<i32>} : memref<64x128xf32, #tpu.memory_space<vmem>>, vector<64x128xf32>,
    %cst_14 = arith.constant 0.000000e+00 : f32
    %13 = vector.broadcast %cst_14 : f32 to vector<8x32xf32>
    %cst_15 = arith.constant 0xFF800000 : f32
    %14 = vector.broadcast %cst_15 : f32 to vector<8x32xf32>
    %c0_16 = arith.constant 0 : index
    %c0_17 = arith.constant 0 : index
    %15 = vector.load %arg11[%c0_16, %c0_17] : memref<64x128xf32, #tpu.memory_space<vmem>>, vector<8x128xf32>
    %c56 = arith.constant 56 : index
    %c0_18 = arith.constant 0 : index
    %16 = vector.load %arg12[%c56, %c0_18] : memref<64x128xf32, #tpu.memory_space<vmem>>, vector<8x128xf32>
    %c0_19 = arith.constant 0 : index
    %c0_20 = arith.constant 0 : index
    %17 = vector.load %arg2[%c0_19, %c0_20] : memref<32x128xf32, #tpu.memory_space<vmem>>, vector<32x128xf32>
    %cst_21 = arith.constant dense<0.000000e+00> : vector<8x128xf32>
    %18 = tpu.matmul %13, %17, %cst_21 {dimension_numbers = #tpu.dot_dimension_numbers<[1], [0], [0], [1], [0, 0, 1, 1], [], []>} : vector<8x32xf32>, vector<32x128xf32>, vector<8x128xf32> -> vector<8x128xf32>
    %19 = arith.addf %15, %18 : vector<8x128xf32>
    %c0_22 = arith.constant 0 : index
    %c0_23 = arith.constant 0 : index
    %20 = vector.load %arg5[%c0_22, %c0_23] : memref<32x128xf32, #tpu.memory_space<vmem>>, vector<32x128xf32>
    %cst_24 = arith.constant dense<0.000000e+00> : vector<8x128xf32>
    %21 = tpu.matmul %13, %20, %cst_24 {dimension_numbers = #tpu.dot_dimension_numbers<[1], [0], [0], [1], [0, 0, 1, 1], [], []>} : vector<8x32xf32>, vector<32x128xf32>, vector<8x128xf32> -> vector<8x128xf32>
    %22 = arith.addf %16, %21 : vector<8x128xf32>
    %23 = vector.extract_strided_slice %19 {offsets = [0, 0], sizes = [8, 32], strides = [1, 1]} : vector<8x128xf32> to vector<8x32xf32>
    %24 = arith.negf %23 : vector<8x32xf32>
    %25 = math.exp %24 : vector<8x32xf32>
    %cst_25 = arith.constant 1.000000e+00 : f32
    %26 = vector.broadcast %cst_25 : f32 to vector<8x32xf32>
    %27 = arith.addf %26, %25 : vector<8x32xf32>
    %28 = arith.divf %26, %27 : vector<8x32xf32>
    %29 = vector.extract_strided_slice %19 {offsets = [0, 32], sizes = [8, 32], strides = [1, 1]} : vector<8x128xf32> to vector<8x32xf32>
    %30 = arith.negf %29 : vector<8x32xf32>
    %31 = math.exp %30 : vector<8x32xf32>
    %cst_26 = arith.constant 1.000000e+00 : f32
    %32 = vector.broadcast %cst_26 : f32 to vector<8x32xf32>
    %33 = arith.addf %32, %31 : vector<8x32xf32>
    %34 = arith.divf %32, %33 : vector<8x32xf32>
    %35 = vector.extract_strided_slice %19 {offsets = [0, 64], sizes = [8, 32], strides = [1, 1]} : vector<8x128xf32> to vector<8x32xf32>
    %36 = math.tanh %35 : vector<8x32xf32>
    %37 = vector.extract_strided_slice %19 {offsets = [0, 96], sizes = [8, 32], strides = [1, 1]} : vector<8x128xf32> to vector<8x32xf32>
    %38 = arith.negf %37 : vector<8x32xf32>
    %39 = math.exp %38 : vector<8x32xf32>
    %cst_27 = arith.constant 1.000000e+00 : f32
    %40 = vector.broadcast %cst_27 : f32 to vector<8x32xf32>
    %41 = arith.addf %40, %39 : vector<8x32xf32>
    %42 = arith.divf %40, %41 : vector<8x32xf32>
    %43 = arith.mulf %34, %13 : vector<8x32xf32>
    %44 = arith.mulf %28, %36 : vector<8x32xf32>
    %45 = arith.addf %43, %44 : vector<8x32xf32>
    %46 = math.tanh %45 : vector<8x32xf32>
    %47 = arith.mulf %42, %46 : vector<8x32xf32>
    %48 = arith.maximumf %14, %47 : vector<8x32xf32>
    %49 = vector.extract_strided_slice %22 {offsets = [0, 0], sizes = [8, 32], strides = [1, 1]} : vector<8x128xf32> to vector<8x32xf32>
    %50 = arith.negf %49 : vector<8x32xf32>
    %51 = math.exp %50 : vector<8x32xf32>
    %cst_28 = arith.constant 1.000000e+00 : f32
    %52 = vector.broadcast %cst_28 : f32 to vector<8x32xf32>
    %53 = arith.addf %52, %51 : vector<8x32xf32>
    %54 = arith.divf %52, %53 : vector<8x32xf32>
    %55 = vector.extract_strided_slice %22 {offsets = [0, 32], sizes = [8, 32], strides = [1, 1]} : vector<8x128xf32> to vector<8x32xf32>
    %56 = arith.negf %55 : vector<8x32xf32>
    %57 = math.exp %56 : vector<8x32xf32>
    %cst_29 = arith.constant 1.000000e+00 : f32
    %58 = vector.broadcast %cst_29 : f32 to vector<8x32xf32>
    %59 = arith.addf %58, %57 : vector<8x32xf32>
    %60 = arith.divf %58, %59 : vector<8x32xf32>
    %61 = vector.extract_strided_slice %22 {offsets = [0, 64], sizes = [8, 32], strides = [1, 1]} : vector<8x128xf32> to vector<8x32xf32>
    %62 = math.tanh %61 : vector<8x32xf32>
    %63 = vector.extract_strided_slice %22 {offsets = [0, 96], sizes = [8, 32], strides = [1, 1]} : vector<8x128xf32> to vector<8x32xf32>
    %64 = arith.negf %63 : vector<8x32xf32>
    %65 = math.exp %64 : vector<8x32xf32>
    %cst_30 = arith.constant 1.000000e+00 : f32
    %66 = vector.broadcast %cst_30 : f32 to vector<8x32xf32>
    %67 = arith.addf %66, %65 : vector<8x32xf32>
    %68 = arith.divf %66, %67 : vector<8x32xf32>
    %69 = arith.mulf %60, %13 : vector<8x32xf32>
    %70 = arith.mulf %54, %62 : vector<8x32xf32>
    %71 = arith.addf %69, %70 : vector<8x32xf32>
    %72 = math.tanh %71 : vector<8x32xf32>
    %73 = arith.mulf %68, %72 : vector<8x32xf32>
    %74 = arith.maximumf %14, %73 : vector<8x32xf32>
    %c8 = arith.constant 8 : index
    %c0_31 = arith.constant 0 : index
    %75 = vector.load %arg11[%c8, %c0_31] : memref<64x128xf32, #tpu.memory_space<vmem>>, vector<8x128xf32>
    %c48 = arith.constant 48 : index
    %c0_32 = arith.constant 0 : index
    %76 = vector.load %arg12[%c48, %c0_32] : memref<64x128xf32, #tpu.memory_space<vmem>>, vector<8x128xf32>
    %c0_33 = arith.constant 0 : index
    %c0_34 = arith.constant 0 : index
    %77 = vector.load %arg2[%c0_33, %c0_34] : memref<32x128xf32, #tpu.memory_space<vmem>>, vector<32x128xf32>
    %cst_35 = arith.constant dense<0.000000e+00> : vector<8x128xf32>
    %78 = tpu.matmul %47, %77, %cst_35 {dimension_numbers = #tpu.dot_dimension_numbers<[1], [0], [0], [1], [0, 0, 1, 1], [], []>} : vector<8x32xf32>, vector<32x128xf32>, vector<8x128xf32> -> vector<8x128xf32>
    %79 = arith.addf %75, %78 : vector<8x128xf32>
    %c0_36 = arith.constant 0 : index
    %c0_37 = arith.constant 0 : index
    %80 = vector.load %arg5[%c0_36, %c0_37] : memref<32x128xf32, #tpu.memory_space<vmem>>, vector<32x128xf32>
    %cst_38 = arith.constant dense<0.000000e+00> : vector<8x128xf32>
    %81 = tpu.matmul %73, %80, %cst_38 {dimension_numbers = #tpu.dot_dimension_numbers<[1], [0], [0], [1], [0, 0, 1, 1], [], []>} : vector<8x32xf32>, vector<32x128xf32>, vector<8x128xf32> -> vector<8x128xf32>
    %82 = arith.addf %76, %81 : vector<8x128xf32>
    %83 = vector.extract_strided_slice %79 {offsets = [0, 0], sizes = [8, 32], strides = [1, 1]} : vector<8x128xf32> to vector<8x32xf32>
    %84 = arith.negf %83 : vector<8x32xf32>
    %85 = math.exp %84 : vector<8x32xf32>
    %cst_39 = arith.constant 1.000000e+00 : f32
    %86 = vector.broadcast %cst_39 : f32 to vector<8x32xf32>
    %87 = arith.addf %86, %85 : vector<8x32xf32>
    %88 = arith.divf %86, %87 : vector<8x32xf32>
    %89 = vector.extract_strided_slice %79 {offsets = [0, 32], sizes = [8, 32], strides = [1, 1]} : vector<8x128xf32> to vector<8x32xf32>
    %90 = arith.negf %89 : vector<8x32xf32>
    %91 = math.exp %90 : vector<8x32xf32>
    %cst_40 = arith.constant 1.000000e+00 : f32
    %92 = vector.broadcast %cst_40 : f32 to vector<8x32xf32>
    %93 = arith.addf %92, %91 : vector<8x32xf32>
    %94 = arith.divf %92, %93 : vector<8x32xf32>
    %95 = vector.extract_strided_slice %79 {offsets = [0, 64], sizes = [8, 32], strides = [1, 1]} : vector<8x128xf32> to vector<8x32xf32>
    %96 = math.tanh %95 : vector<8x32xf32>
    %97 = vector.extract_strided_slice %79 {offsets = [0, 96], sizes = [8, 32], strides = [1, 1]} : vector<8x128xf32> to vector<8x32xf32>
    %98 = arith.negf %97 : vector<8x32xf32>
    %99 = math.exp %98 : vector<8x32xf32>
    %cst_41 = arith.constant 1.000000e+00 : f32
    %100 = vector.broadcast %cst_41 : f32 to vector<8x32xf32>
    %101 = arith.addf %100, %99 : vector<8x32xf32>
    %102 = arith.divf %100, %101 : vector<8x32xf32>
    %103 = arith.mulf %94, %45 : vector<8x32xf32>
    %104 = arith.mulf %88, %96 : vector<8x32xf32>
    %105 = arith.addf %103, %104 : vector<8x32xf32>
    %106 = math.tanh %105 : vector<8x32xf32>
    %107 = arith.mulf %102, %106 : vector<8x32xf32>
    %108 = arith.maximumf %48, %107 : vector<8x32xf32>
    %109 = vector.extract_strided_slice %82 {offsets = [0, 0], sizes = [8, 32], strides = [1, 1]} : vector<8x128xf32> to vector<8x32xf32>
    %110 = arith.negf %109 : vector<8x32xf32>
    %111 = math.exp %110 : vector<8x32xf32>
    %cst_42 = arith.constant 1.000000e+00 : f32
    %112 = vector.broadcast %cst_42 : f32 to vector<8x32xf32>
    %113 = arith.addf %112, %111 : vector<8x32xf32>
    %114 = arith.divf %112, %113 : vector<8x32xf32>
    %115 = vector.extract_strided_slice %82 {offsets = [0, 32], sizes = [8, 32], strides = [1, 1]} : vector<8x128xf32> to vector<8x32xf32>
    %116 = arith.negf %115 : vector<8x32xf32>
    %117 = math.exp %116 : vector<8x32xf32>
    %cst_43 = arith.constant 1.000000e+00 : f32
    %118 = vector.broadcast %cst_43 : f32 to vector<8x32xf32>
    %119 = arith.addf %118, %117 : vector<8x32xf32>
    %120 = arith.divf %118, %119 : vector<8x32xf32>
    %121 = vector.extract_strided_slice %82 {offsets = [0, 64], sizes = [8, 32], strides = [1, 1]} : vector<8x128xf32> to vector<8x32xf32>
    %122 = math.tanh %121 : vector<8x32xf32>
    %123 = vector.extract_strided_slice %82 {offsets = [0, 96], sizes = [8, 32], strides = [1, 1]} : vector<8x128xf32> to vector<8x32xf32>
    %124 = arith.negf %123 : vector<8x32xf32>
    %125 = math.exp %124 : vector<8x32xf32>
    %cst_44 = arith.constant 1.000000e+00 : f32
    %126 = vector.broadcast %cst_44 : f32 to vector<8x32xf32>
    %127 = arith.addf %126, %125 : vector<8x32xf32>
    %128 = arith.divf %126, %127 : vector<8x32xf32>
    %129 = arith.mulf %120, %71 : vector<8x32xf32>
    %130 = arith.mulf %114, %122 : vector<8x32xf32>
    %131 = arith.addf %129, %130 : vector<8x32xf32>
    %132 = math.tanh %131 : vector<8x32xf32>
    %133 = arith.mulf %128, %132 : vector<8x32xf32>
    %134 = arith.maximumf %74, %133 : vector<8x32xf32>
    %c16 = arith.constant 16 : index
    %c0_45 = arith.constant 0 : index
    %135 = vector.load %arg11[%c16, %c0_45] : memref<64x128xf32, #tpu.memory_space<vmem>>, vector<8x128xf32>
    %c40 = arith.constant 40 : index
    %c0_46 = arith.constant 0 : index
    %136 = vector.load %arg12[%c40, %c0_46] : memref<64x128xf32, #tpu.memory_space<vmem>>, vector<8x128xf32>
    %c0_47 = arith.constant 0 : index
    %c0_48 = arith.constant 0 : index
    %137 = vector.load %arg2[%c0_47, %c0_48] : memref<32x128xf32, #tpu.memory_space<vmem>>, vector<32x128xf32>
    %cst_49 = arith.constant dense<0.000000e+00> : vector<8x128xf32>
    %138 = tpu.matmul %107, %137, %cst_49 {dimension_numbers = #tpu.dot_dimension_numbers<[1], [0], [0], [1], [0, 0, 1, 1], [], []>} : vector<8x32xf32>, vector<32x128xf32>, vector<8x128xf32> -> vector<8x128xf32>
    %139 = arith.addf %135, %138 : vector<8x128xf32>
    %c0_50 = arith.constant 0 : index
    %c0_51 = arith.constant 0 : index
    %140 = vector.load %arg5[%c0_50, %c0_51] : memref<32x128xf32, #tpu.memory_space<vmem>>, vector<32x128xf32>
    %cst_52 = arith.constant dense<0.000000e+00> : vector<8x128xf32>
    %141 = tpu.matmul %133, %140, %cst_52 {dimension_numbers = #tpu.dot_dimension_numbers<[1], [0], [0], [1], [0, 0, 1, 1], [], []>} : vector<8x32xf32>, vector<32x128xf32>, vector<8x128xf32> -> vector<8x128xf32>
    %142 = arith.addf %136, %141 : vector<8x128xf32>
    %143 = vector.extract_strided_slice %139 {offsets = [0, 0], sizes = [8, 32], strides = [1, 1]} : vector<8x128xf32> to vector<8x32xf32>
    %144 = arith.negf %143 : vector<8x32xf32>
    %145 = math.exp %144 : vector<8x32xf32>
    %cst_53 = arith.constant 1.000000e+00 : f32
    %146 = vector.broadcast %cst_53 : f32 to vector<8x32xf32>
    %147 = arith.addf %146, %145 : vector<8x32xf32>
    %148 = arith.divf %146, %147 : vector<8x32xf32>
    %149 = vector.extract_strided_slice %139 {offsets = [0, 32], sizes = [8, 32], strides = [1, 1]} : vector<8x128xf32> to vector<8x32xf32>
    %150 = arith.negf %149 : vector<8x32xf32>
    %151 = math.exp %150 : vector<8x32xf32>
    %cst_54 = arith.constant 1.000000e+00 : f32
    %152 = vector.broadcast %cst_54 : f32 to vector<8x32xf32>
    %153 = arith.addf %152, %151 : vector<8x32xf32>
    %154 = arith.divf %152, %153 : vector<8x32xf32>
    %155 = vector.extract_strided_slice %139 {offsets = [0, 64], sizes = [8, 32], strides = [1, 1]} : vector<8x128xf32> to vector<8x32xf32>
    %156 = math.tanh %155 : vector<8x32xf32>
    %157 = vector.extract_strided_slice %139 {offsets = [0, 96], sizes = [8, 32], strides = [1, 1]} : vector<8x128xf32> to vector<8x32xf32>
    %158 = arith.negf %157 : vector<8x32xf32>
    %159 = math.exp %158 : vector<8x32xf32>
    %cst_55 = arith.constant 1.000000e+00 : f32
    %160 = vector.broadcast %cst_55 : f32 to vector<8x32xf32>
    %161 = arith.addf %160, %159 : vector<8x32xf32>
    %162 = arith.divf %160, %161 : vector<8x32xf32>
    %163 = arith.mulf %154, %105 : vector<8x32xf32>
    %164 = arith.mulf %148, %156 : vector<8x32xf32>
    %165 = arith.addf %163, %164 : vector<8x32xf32>
    %166 = math.tanh %165 : vector<8x32xf32>
    %167 = arith.mulf %162, %166 : vector<8x32xf32>
    %168 = arith.maximumf %108, %167 : vector<8x32xf32>
    %169 = vector.extract_strided_slice %142 {offsets = [0, 0], sizes = [8, 32], strides = [1, 1]} : vector<8x128xf32> to vector<8x32xf32>
    %170 = arith.negf %169 : vector<8x32xf32>
    %171 = math.exp %170 : vector<8x32xf32>
    %cst_56 = arith.constant 1.000000e+00 : f32
    %172 = vector.broadcast %cst_56 : f32 to vector<8x32xf32>
    %173 = arith.addf %172, %171 : vector<8x32xf32>
    %174 = arith.divf %172, %173 : vector<8x32xf32>
    %175 = vector.extract_strided_slice %142 {offsets = [0, 32], sizes = [8, 32], strides = [1, 1]} : vector<8x128xf32> to vector<8x32xf32>
    %176 = arith.negf %175 : vector<8x32xf32>
    %177 = math.exp %176 : vector<8x32xf32>
    %cst_57 = arith.constant 1.000000e+00 : f32
    %178 = vector.broadcast %cst_57 : f32 to vector<8x32xf32>
    %179 = arith.addf %178, %177 : vector<8x32xf32>
    %180 = arith.divf %178, %179 : vector<8x32xf32>
    %181 = vector.extract_strided_slice %142 {offsets = [0, 64], sizes = [8, 32], strides = [1, 1]} : vector<8x128xf32> to vector<8x32xf32>
    %182 = math.tanh %181 : vector<8x32xf32>
    %183 = vector.extract_strided_slice %142 {offsets = [0, 96], sizes = [8, 32], strides = [1, 1]} : vector<8x128xf32> to vector<8x32xf32>
    %184 = arith.negf %183 : vector<8x32xf32>
    %185 = math.exp %184 : vector<8x32xf32>
    %cst_58 = arith.constant 1.000000e+00 : f32
    %186 = vector.broadcast %cst_58 : f32 to vector<8x32xf32>
    %187 = arith.addf %186, %185 : vector<8x32xf32>
    %188 = arith.divf %186, %187 : vector<8x32xf32>
    %189 = arith.mulf %180, %131 : vector<8x32xf32>
    %190 = arith.mulf %174, %182 : vector<8x32xf32>
    %191 = arith.addf %189, %190 : vector<8x32xf32>
    %192 = math.tanh %191 : vector<8x32xf32>
    %193 = arith.mulf %188, %192 : vector<8x32xf32>
    %194 = arith.maximumf %134, %193 : vector<8x32xf32>
    %c24 = arith.constant 24 : index
    %c0_59 = arith.constant 0 : index
    %195 = vector.load %arg11[%c24, %c0_59] : memref<64x128xf32, #tpu.memory_space<vmem>>, vector<8x128xf32>
    %c32 = arith.constant 32 : index
    %c0_60 = arith.constant 0 : index
    %196 = vector.load %arg12[%c32, %c0_60] : memref<64x128xf32, #tpu.memory_space<vmem>>, vector<8x128xf32>
    %c0_61 = arith.constant 0 : index
    %c0_62 = arith.constant 0 : index
    %197 = vector.load %arg2[%c0_61, %c0_62] : memref<32x128xf32, #tpu.memory_space<vmem>>, vector<32x128xf32>
    %cst_63 = arith.constant dense<0.000000e+00> : vector<8x128xf32>
    %198 = tpu.matmul %167, %197, %cst_63 {dimension_numbers = #tpu.dot_dimension_numbers<[1], [0], [0], [1], [0, 0, 1, 1], [], []>} : vector<8x32xf32>, vector<32x128xf32>, vector<8x128xf32> -> vector<8x128xf32>
    %199 = arith.addf %195, %198 : vector<8x128xf32>
    %c0_64 = arith.constant 0 : index
    %c0_65 = arith.constant 0 : index
    %200 = vector.load %arg5[%c0_64, %c0_65] : memref<32x128xf32, #tpu.memory_space<vmem>>, vector<32x128xf32>
    %cst_66 = arith.constant dense<0.000000e+00> : vector<8x128xf32>
    %201 = tpu.matmul %193, %200, %cst_66 {dimension_numbers = #tpu.dot_dimension_numbers<[1], [0], [0], [1], [0, 0, 1, 1], [], []>} : vector<8x32xf32>, vector<32x128xf32>, vector<8x128xf32> -> vector<8x128xf32>
    %202 = arith.addf %196, %201 : vector<8x128xf32>
    %203 = vector.extract_strided_slice %199 {offsets = [0, 0], sizes = [8, 32], strides = [1, 1]} : vector<8x128xf32> to vector<8x32xf32>
    %204 = arith.negf %203 : vector<8x32xf32>
    %205 = math.exp %204 : vector<8x32xf32>
    %cst_67 = arith.constant 1.000000e+00 : f32
    %206 = vector.broadcast %cst_67 : f32 to vector<8x32xf32>
    %207 = arith.addf %206, %205 : vector<8x32xf32>
    %208 = arith.divf %206, %207 : vector<8x32xf32>
    %209 = vector.extract_strided_slice %199 {offsets = [0, 32], sizes = [8, 32], strides = [1, 1]} : vector<8x128xf32> to vector<8x32xf32>
    %210 = arith.negf %209 : vector<8x32xf32>
    %211 = math.exp %210 : vector<8x32xf32>
    %cst_68 = arith.constant 1.000000e+00 : f32
    %212 = vector.broadcast %cst_68 : f32 to vector<8x32xf32>
    %213 = arith.addf %212, %211 : vector<8x32xf32>
    %214 = arith.divf %212, %213 : vector<8x32xf32>
    %215 = vector.extract_strided_slice %199 {offsets = [0, 64], sizes = [8, 32], strides = [1, 1]} : vector<8x128xf32> to vector<8x32xf32>
    %216 = math.tanh %215 : vector<8x32xf32>
    %217 = vector.extract_strided_slice %199 {offsets = [0, 96], sizes = [8, 32], strides = [1, 1]} : vector<8x128xf32> to vector<8x32xf32>
    %218 = arith.negf %217 : vector<8x32xf32>
    %219 = math.exp %218 : vector<8x32xf32>
    %cst_69 = arith.constant 1.000000e+00 : f32
    %220 = vector.broadcast %cst_69 : f32 to vector<8x32xf32>
    %221 = arith.addf %220, %219 : vector<8x32xf32>
    %222 = arith.divf %220, %221 : vector<8x32xf32>
    %223 = arith.mulf %214, %165 : vector<8x32xf32>
    %224 = arith.mulf %208, %216 : vector<8x32xf32>
    %225 = arith.addf %223, %224 : vector<8x32xf32>
    %226 = math.tanh %225 : vector<8x32xf32>
    %227 = arith.mulf %222, %226 : vector<8x32xf32>
    %228 = arith.maximumf %168, %227 : vector<8x32xf32>
    %229 = vector.extract_strided_slice %202 {offsets = [0, 0], sizes = [8, 32], strides = [1, 1]} : vector<8x128xf32> to vector<8x32xf32>
    %230 = arith.negf %229 : vector<8x32xf32>
    %231 = math.exp %230 : vector<8x32xf32>
    %cst_70 = arith.constant 1.000000e+00 : f32
    %232 = vector.broadcast %cst_70 : f32 to vector<8x32xf32>
    %233 = arith.addf %232, %231 : vector<8x32xf32>
    %234 = arith.divf %232, %233 : vector<8x32xf32>
    %235 = vector.extract_strided_slice %202 {offsets = [0, 32], sizes = [8, 32], strides = [1, 1]} : vector<8x128xf32> to vector<8x32xf32>
    %236 = arith.negf %235 : vector<8x32xf32>
    %237 = math.exp %236 : vector<8x32xf32>
    %cst_71 = arith.constant 1.000000e+00 : f32
    %238 = vector.broadcast %cst_71 : f32 to vector<8x32xf32>
    %239 = arith.addf %238, %237 : vector<8x32xf32>
    %240 = arith.divf %238, %239 : vector<8x32xf32>
    %241 = vector.extract_strided_slice %202 {offsets = [0, 64], sizes = [8, 32], strides = [1, 1]} : vector<8x128xf32> to vector<8x32xf32>
    %242 = math.tanh %241 : vector<8x32xf32>
    %243 = vector.extract_strided_slice %202 {offsets = [0, 96], sizes = [8, 32], strides = [1, 1]} : vector<8x128xf32> to vector<8x32xf32>
    %244 = arith.negf %243 : vector<8x32xf32>
    %245 = math.exp %244 : vector<8x32xf32>
    %cst_72 = arith.constant 1.000000e+00 : f32
    %246 = vector.broadcast %cst_72 : f32 to vector<8x32xf32>
    %247 = arith.addf %246, %245 : vector<8x32xf32>
    %248 = arith.divf %246, %247 : vector<8x32xf32>
    %249 = arith.mulf %240, %191 : vector<8x32xf32>
    %250 = arith.mulf %234, %242 : vector<8x32xf32>
    %251 = arith.addf %249, %250 : vector<8x32xf32>
    %252 = math.tanh %251 : vector<8x32xf32>
    %253 = arith.mulf %248, %252 : vector<8x32xf32>
    %254 = arith.maximumf %194, %253 : vector<8x32xf32>
    %c32_73 = arith.constant 32 : index
    %c0_74 = arith.constant 0 : index
    %255 = vector.load %arg11[%c32_73, %c0_74] : memref<64x128xf32, #tpu.memory_space<vmem>>, vector<8x128xf32>
    %c24_75 = arith.constant 24 : index
    %c0_76 = arith.constant 0 : index
    %256 = vector.load %arg12[%c24_75, %c0_76] : memref<64x128xf32, #tpu.memory_space<vmem>>, vector<8x128xf32>
    %c0_77 = arith.constant 0 : index
    %c0_78 = arith.constant 0 : index
    %257 = vector.load %arg2[%c0_77, %c0_78] : memref<32x128xf32, #tpu.memory_space<vmem>>, vector<32x128xf32>
    %cst_79 = arith.constant dense<0.000000e+00> : vector<8x128xf32>
    %258 = tpu.matmul %227, %257, %cst_79 {dimension_numbers = #tpu.dot_dimension_numbers<[1], [0], [0], [1], [0, 0, 1, 1], [], []>} : vector<8x32xf32>, vector<32x128xf32>, vector<8x128xf32> -> vector<8x128xf32>
    %259 = arith.addf %255, %258 : vector<8x128xf32>
    %c0_80 = arith.constant 0 : index
    %c0_81 = arith.constant 0 : index
    %260 = vector.load %arg5[%c0_80, %c0_81] : memref<32x128xf32, #tpu.memory_space<vmem>>, vector<32x128xf32>
    %cst_82 = arith.constant dense<0.000000e+00> : vector<8x128xf32>
    %261 = tpu.matmul %253, %260, %cst_82 {dimension_numbers = #tpu.dot_dimension_numbers<[1], [0], [0], [1], [0, 0, 1, 1], [], []>} : vector<8x32xf32>, vector<32x128xf32>, vector<8x128xf32> -> vector<8x128xf32>
    %262 = arith.addf %256, %261 : vector<8x128xf32>
    %263 = vector.extract_strided_slice %259 {offsets = [0, 0], sizes = [8, 32], strides = [1, 1]} : vector<8x128xf32> to vector<8x32xf32>
    %264 = arith.negf %263 : vector<8x32xf32>
    %265 = math.exp %264 : vector<8x32xf32>
    %cst_83 = arith.constant 1.000000e+00 : f32
    %266 = vector.broadcast %cst_83 : f32 to vector<8x32xf32>
    %267 = arith.addf %266, %265 : vector<8x32xf32>
    %268 = arith.divf %266, %267 : vector<8x32xf32>
    %269 = vector.extract_strided_slice %259 {offsets = [0, 32], sizes = [8, 32], strides = [1, 1]} : vector<8x128xf32> to vector<8x32xf32>
    %270 = arith.negf %269 : vector<8x32xf32>
    %271 = math.exp %270 : vector<8x32xf32>
    %cst_84 = arith.constant 1.000000e+00 : f32
    %272 = vector.broadcast %cst_84 : f32 to vector<8x32xf32>
    %273 = arith.addf %272, %271 : vector<8x32xf32>
    %274 = arith.divf %272, %273 : vector<8x32xf32>
    %275 = vector.extract_strided_slice %259 {offsets = [0, 64], sizes = [8, 32], strides = [1, 1]} : vector<8x128xf32> to vector<8x32xf32>
    %276 = math.tanh %275 : vector<8x32xf32>
    %277 = vector.extract_strided_slice %259 {offsets = [0, 96], sizes = [8, 32], strides = [1, 1]} : vector<8x128xf32> to vector<8x32xf32>
    %278 = arith.negf %277 : vector<8x32xf32>
    %279 = math.exp %278 : vector<8x32xf32>
    %cst_85 = arith.constant 1.000000e+00 : f32
    %280 = vector.broadcast %cst_85 : f32 to vector<8x32xf32>
    %281 = arith.addf %280, %279 : vector<8x32xf32>
    %282 = arith.divf %280, %281 : vector<8x32xf32>
    %283 = arith.mulf %274, %225 : vector<8x32xf32>
    %284 = arith.mulf %268, %276 : vector<8x32xf32>
    %285 = arith.addf %283, %284 : vector<8x32xf32>
    %286 = math.tanh %285 : vector<8x32xf32>
    %287 = arith.mulf %282, %286 : vector<8x32xf32>
    %288 = arith.maximumf %228, %287 : vector<8x32xf32>
    %289 = vector.extract_strided_slice %262 {offsets = [0, 0], sizes = [8, 32], strides = [1, 1]} : vector<8x128xf32> to vector<8x32xf32>
    %290 = arith.negf %289 : vector<8x32xf32>
    %291 = math.exp %290 : vector<8x32xf32>
    %cst_86 = arith.constant 1.000000e+00 : f32
    %292 = vector.broadcast %cst_86 : f32 to vector<8x32xf32>
    %293 = arith.addf %292, %291 : vector<8x32xf32>
    %294 = arith.divf %292, %293 : vector<8x32xf32>
    %295 = vector.extract_strided_slice %262 {offsets = [0, 32], sizes = [8, 32], strides = [1, 1]} : vector<8x128xf32> to vector<8x32xf32>
    %296 = arith.negf %295 : vector<8x32xf32>
    %297 = math.exp %296 : vector<8x32xf32>
    %cst_87 = arith.constant 1.000000e+00 : f32
    %298 = vector.broadcast %cst_87 : f32 to vector<8x32xf32>
    %299 = arith.addf %298, %297 : vector<8x32xf32>
    %300 = arith.divf %298, %299 : vector<8x32xf32>
    %301 = vector.extract_strided_slice %262 {offsets = [0, 64], sizes = [8, 32], strides = [1, 1]} : vector<8x128xf32> to vector<8x32xf32>
    %302 = math.tanh %301 : vector<8x32xf32>
    %303 = vector.extract_strided_slice %262 {offsets = [0, 96], sizes = [8, 32], strides = [1, 1]} : vector<8x128xf32> to vector<8x32xf32>
    %304 = arith.negf %303 : vector<8x32xf32>
    %305 = math.exp %304 : vector<8x32xf32>
    %cst_88 = arith.constant 1.000000e+00 : f32
    %306 = vector.broadcast %cst_88 : f32 to vector<8x32xf32>
    %307 = arith.addf %306, %305 : vector<8x32xf32>
    %308 = arith.divf %306, %307 : vector<8x32xf32>
    %309 = arith.mulf %300, %251 : vector<8x32xf32>
    %310 = arith.mulf %294, %302 : vector<8x32xf32>
    %311 = arith.addf %309, %310 : vector<8x32xf32>
    %312 = math.tanh %311 : vector<8x32xf32>
    %313 = arith.mulf %308, %312 : vector<8x32xf32>
    %314 = arith.maximumf %254, %313 : vector<8x32xf32>
    %c40_89 = arith.constant 40 : index
    %c0_90 = arith.constant 0 : index
    %315 = vector.load %arg11[%c40_89, %c0_90] : memref<64x128xf32, #tpu.memory_space<vmem>>, vector<8x128xf32>
    %c16_91 = arith.constant 16 : index
    %c0_92 = arith.constant 0 : index
    %316 = vector.load %arg12[%c16_91, %c0_92] : memref<64x128xf32, #tpu.memory_space<vmem>>, vector<8x128xf32>
    %c0_93 = arith.constant 0 : index
    %c0_94 = arith.constant 0 : index
    %317 = vector.load %arg2[%c0_93, %c0_94] : memref<32x128xf32, #tpu.memory_space<vmem>>, vector<32x128xf32>
    %cst_95 = arith.constant dense<0.000000e+00> : vector<8x128xf32>
    %318 = tpu.matmul %287, %317, %cst_95 {dimension_numbers = #tpu.dot_dimension_numbers<[1], [0], [0], [1], [0, 0, 1, 1], [], []>} : vector<8x32xf32>, vector<32x128xf32>, vector<8x128xf32> -> vector<8x128xf32>
    %319 = arith.addf %315, %318 : vector<8x128xf32>
    %c0_96 = arith.constant 0 : index
    %c0_97 = arith.constant 0 : index
    %320 = vector.load %arg5[%c0_96, %c0_97] : memref<32x128xf32, #tpu.memory_space<vmem>>, vector<32x128xf32>
    %cst_98 = arith.constant dense<0.000000e+00> : vector<8x128xf32>
    %321 = tpu.matmul %313, %320, %cst_98 {dimension_numbers = #tpu.dot_dimension_numbers<[1], [0], [0], [1], [0, 0, 1, 1], [], []>} : vector<8x32xf32>, vector<32x128xf32>, vector<8x128xf32> -> vector<8x128xf32>
    %322 = arith.addf %316, %321 : vector<8x128xf32>
    %323 = vector.extract_strided_slice %319 {offsets = [0, 0], sizes = [8, 32], strides = [1, 1]} : vector<8x128xf32> to vector<8x32xf32>
    %324 = arith.negf %323 : vector<8x32xf32>
    %325 = math.exp %324 : vector<8x32xf32>
    %cst_99 = arith.constant 1.000000e+00 : f32
    %326 = vector.broadcast %cst_99 : f32 to vector<8x32xf32>
    %327 = arith.addf %326, %325 : vector<8x32xf32>
    %328 = arith.divf %326, %327 : vector<8x32xf32>
    %329 = vector.extract_strided_slice %319 {offsets = [0, 32], sizes = [8, 32], strides = [1, 1]} : vector<8x128xf32> to vector<8x32xf32>
    %330 = arith.negf %329 : vector<8x32xf32>
    %331 = math.exp %330 : vector<8x32xf32>
    %cst_100 = arith.constant 1.000000e+00 : f32
    %332 = vector.broadcast %cst_100 : f32 to vector<8x32xf32>
    %333 = arith.addf %332, %331 : vector<8x32xf32>
    %334 = arith.divf %332, %333 : vector<8x32xf32>
    %335 = vector.extract_strided_slice %319 {offsets = [0, 64], sizes = [8, 32], strides = [1, 1]} : vector<8x128xf32> to vector<8x32xf32>
    %336 = math.tanh %335 : vector<8x32xf32>
    %337 = vector.extract_strided_slice %319 {offsets = [0, 96], sizes = [8, 32], strides = [1, 1]} : vector<8x128xf32> to vector<8x32xf32>
    %338 = arith.negf %337 : vector<8x32xf32>
    %339 = math.exp %338 : vector<8x32xf32>
    %cst_101 = arith.constant 1.000000e+00 : f32
    %340 = vector.broadcast %cst_101 : f32 to vector<8x32xf32>
    %341 = arith.addf %340, %339 : vector<8x32xf32>
    %342 = arith.divf %340, %341 : vector<8x32xf32>
    %343 = arith.mulf %334, %285 : vector<8x32xf32>
    %344 = arith.mulf %328, %336 : vector<8x32xf32>
    %345 = arith.addf %343, %344 : vector<8x32xf32>
    %346 = math.tanh %345 : vector<8x32xf32>
    %347 = arith.mulf %342, %346 : vector<8x32xf32>
    %348 = arith.maximumf %288, %347 : vector<8x32xf32>
    %349 = vector.extract_strided_slice %322 {offsets = [0, 0], sizes = [8, 32], strides = [1, 1]} : vector<8x128xf32> to vector<8x32xf32>
    %350 = arith.negf %349 : vector<8x32xf32>
    %351 = math.exp %350 : vector<8x32xf32>
    %cst_102 = arith.constant 1.000000e+00 : f32
    %352 = vector.broadcast %cst_102 : f32 to vector<8x32xf32>
    %353 = arith.addf %352, %351 : vector<8x32xf32>
    %354 = arith.divf %352, %353 : vector<8x32xf32>
    %355 = vector.extract_strided_slice %322 {offsets = [0, 32], sizes = [8, 32], strides = [1, 1]} : vector<8x128xf32> to vector<8x32xf32>
    %356 = arith.negf %355 : vector<8x32xf32>
    %357 = math.exp %356 : vector<8x32xf32>
    %cst_103 = arith.constant 1.000000e+00 : f32
    %358 = vector.broadcast %cst_103 : f32 to vector<8x32xf32>
    %359 = arith.addf %358, %357 : vector<8x32xf32>
    %360 = arith.divf %358, %359 : vector<8x32xf32>
    %361 = vector.extract_strided_slice %322 {offsets = [0, 64], sizes = [8, 32], strides = [1, 1]} : vector<8x128xf32> to vector<8x32xf32>
    %362 = math.tanh %361 : vector<8x32xf32>
    %363 = vector.extract_strided_slice %322 {offsets = [0, 96], sizes = [8, 32], strides = [1, 1]} : vector<8x128xf32> to vector<8x32xf32>
    %364 = arith.negf %363 : vector<8x32xf32>
    %365 = math.exp %364 : vector<8x32xf32>
    %cst_104 = arith.constant 1.000000e+00 : f32
    %366 = vector.broadcast %cst_104 : f32 to vector<8x32xf32>
    %367 = arith.addf %366, %365 : vector<8x32xf32>
    %368 = arith.divf %366, %367 : vector<8x32xf32>
    %369 = arith.mulf %360, %311 : vector<8x32xf32>
    %370 = arith.mulf %354, %362 : vector<8x32xf32>
    %371 = arith.addf %369, %370 : vector<8x32xf32>
    %372 = math.tanh %371 : vector<8x32xf32>
    %373 = arith.mulf %368, %372 : vector<8x32xf32>
    %374 = arith.maximumf %314, %373 : vector<8x32xf32>
    %c48_105 = arith.constant 48 : index
    %c0_106 = arith.constant 0 : index
    %375 = vector.load %arg11[%c48_105, %c0_106] : memref<64x128xf32, #tpu.memory_space<vmem>>, vector<8x128xf32>
    %c8_107 = arith.constant 8 : index
    %c0_108 = arith.constant 0 : index
    %376 = vector.load %arg12[%c8_107, %c0_108] : memref<64x128xf32, #tpu.memory_space<vmem>>, vector<8x128xf32>
    %c0_109 = arith.constant 0 : index
    %c0_110 = arith.constant 0 : index
    %377 = vector.load %arg2[%c0_109, %c0_110] : memref<32x128xf32, #tpu.memory_space<vmem>>, vector<32x128xf32>
    %cst_111 = arith.constant dense<0.000000e+00> : vector<8x128xf32>
    %378 = tpu.matmul %347, %377, %cst_111 {dimension_numbers = #tpu.dot_dimension_numbers<[1], [0], [0], [1], [0, 0, 1, 1], [], []>} : vector<8x32xf32>, vector<32x128xf32>, vector<8x128xf32> -> vector<8x128xf32>
    %379 = arith.addf %375, %378 : vector<8x128xf32>
    %c0_112 = arith.constant 0 : index
    %c0_113 = arith.constant 0 : index
    %380 = vector.load %arg5[%c0_112, %c0_113] : memref<32x128xf32, #tpu.memory_space<vmem>>, vector<32x128xf32>
    %cst_114 = arith.constant dense<0.000000e+00> : vector<8x128xf32>
    %381 = tpu.matmul %373, %380, %cst_114 {dimension_numbers = #tpu.dot_dimension_numbers<[1], [0], [0], [1], [0, 0, 1, 1], [], []>} : vector<8x32xf32>, vector<32x128xf32>, vector<8x128xf32> -> vector<8x128xf32>
    %382 = arith.addf %376, %381 : vector<8x128xf32>
    %383 = vector.extract_strided_slice %379 {offsets = [0, 0], sizes = [8, 32], strides = [1, 1]} : vector<8x128xf32> to vector<8x32xf32>
    %384 = arith.negf %383 : vector<8x32xf32>
    %385 = math.exp %384 : vector<8x32xf32>
    %cst_115 = arith.constant 1.000000e+00 : f32
    %386 = vector.broadcast %cst_115 : f32 to vector<8x32xf32>
    %387 = arith.addf %386, %385 : vector<8x32xf32>
    %388 = arith.divf %386, %387 : vector<8x32xf32>
    %389 = vector.extract_strided_slice %379 {offsets = [0, 32], sizes = [8, 32], strides = [1, 1]} : vector<8x128xf32> to vector<8x32xf32>
    %390 = arith.negf %389 : vector<8x32xf32>
    %391 = math.exp %390 : vector<8x32xf32>
    %cst_116 = arith.constant 1.000000e+00 : f32
    %392 = vector.broadcast %cst_116 : f32 to vector<8x32xf32>
    %393 = arith.addf %392, %391 : vector<8x32xf32>
    %394 = arith.divf %392, %393 : vector<8x32xf32>
    %395 = vector.extract_strided_slice %379 {offsets = [0, 64], sizes = [8, 32], strides = [1, 1]} : vector<8x128xf32> to vector<8x32xf32>
    %396 = math.tanh %395 : vector<8x32xf32>
    %397 = vector.extract_strided_slice %379 {offsets = [0, 96], sizes = [8, 32], strides = [1, 1]} : vector<8x128xf32> to vector<8x32xf32>
    %398 = arith.negf %397 : vector<8x32xf32>
    %399 = math.exp %398 : vector<8x32xf32>
    %cst_117 = arith.constant 1.000000e+00 : f32
    %400 = vector.broadcast %cst_117 : f32 to vector<8x32xf32>
    %401 = arith.addf %400, %399 : vector<8x32xf32>
    %402 = arith.divf %400, %401 : vector<8x32xf32>
    %403 = arith.mulf %394, %345 : vector<8x32xf32>
    %404 = arith.mulf %388, %396 : vector<8x32xf32>
    %405 = arith.addf %403, %404 : vector<8x32xf32>
    %406 = math.tanh %405 : vector<8x32xf32>
    %407 = arith.mulf %402, %406 : vector<8x32xf32>
    %408 = arith.maximumf %348, %407 : vector<8x32xf32>
    %409 = vector.extract_strided_slice %382 {offsets = [0, 0], sizes = [8, 32], strides = [1, 1]} : vector<8x128xf32> to vector<8x32xf32>
    %410 = arith.negf %409 : vector<8x32xf32>
    %411 = math.exp %410 : vector<8x32xf32>
    %cst_118 = arith.constant 1.000000e+00 : f32
    %412 = vector.broadcast %cst_118 : f32 to vector<8x32xf32>
    %413 = arith.addf %412, %411 : vector<8x32xf32>
    %414 = arith.divf %412, %413 : vector<8x32xf32>
    %415 = vector.extract_strided_slice %382 {offsets = [0, 32], sizes = [8, 32], strides = [1, 1]} : vector<8x128xf32> to vector<8x32xf32>
    %416 = arith.negf %415 : vector<8x32xf32>
    %417 = math.exp %416 : vector<8x32xf32>
    %cst_119 = arith.constant 1.000000e+00 : f32
    %418 = vector.broadcast %cst_119 : f32 to vector<8x32xf32>
    %419 = arith.addf %418, %417 : vector<8x32xf32>
    %420 = arith.divf %418, %419 : vector<8x32xf32>
    %421 = vector.extract_strided_slice %382 {offsets = [0, 64], sizes = [8, 32], strides = [1, 1]} : vector<8x128xf32> to vector<8x32xf32>
    %422 = math.tanh %421 : vector<8x32xf32>
    %423 = vector.extract_strided_slice %382 {offsets = [0, 96], sizes = [8, 32], strides = [1, 1]} : vector<8x128xf32> to vector<8x32xf32>
    %424 = arith.negf %423 : vector<8x32xf32>
    %425 = math.exp %424 : vector<8x32xf32>
    %cst_120 = arith.constant 1.000000e+00 : f32
    %426 = vector.broadcast %cst_120 : f32 to vector<8x32xf32>
    %427 = arith.addf %426, %425 : vector<8x32xf32>
    %428 = arith.divf %426, %427 : vector<8x32xf32>
    %429 = arith.mulf %420, %371 : vector<8x32xf32>
    %430 = arith.mulf %414, %422 : vector<8x32xf32>
    %431 = arith.addf %429, %430 : vector<8x32xf32>
    %432 = math.tanh %431 : vector<8x32xf32>
    %433 = arith.mulf %428, %432 : vector<8x32xf32>
    %434 = arith.maximumf %374, %433 : vector<8x32xf32>
    %c56_121 = arith.constant 56 : index
    %c0_122 = arith.constant 0 : index
    %435 = vector.load %arg11[%c56_121, %c0_122] : memref<64x128xf32, #tpu.memory_space<vmem>>, vector<8x128xf32>
    %c0_123 = arith.constant 0 : index
    %c0_124 = arith.constant 0 : index
    %436 = vector.load %arg12[%c0_123, %c0_124] : memref<64x128xf32, #tpu.memory_space<vmem>>, vector<8x128xf32>
    %c0_125 = arith.constant 0 : index
    %c0_126 = arith.constant 0 : index
    %437 = vector.load %arg2[%c0_125, %c0_126] : memref<32x128xf32, #tpu.memory_space<vmem>>, vector<32x128xf32>
    %cst_127 = arith.constant dense<0.000000e+00> : vector<8x128xf32>
    %438 = tpu.matmul %407, %437, %cst_127 {dimension_numbers = #tpu.dot_dimension_numbers<[1], [0], [0], [1], [0, 0, 1, 1], [], []>} : vector<8x32xf32>, vector<32x128xf32>, vector<8x128xf32> -> vector<8x128xf32>
    %439 = arith.addf %435, %438 : vector<8x128xf32>
    %c0_128 = arith.constant 0 : index
    %c0_129 = arith.constant 0 : index
    %440 = vector.load %arg5[%c0_128, %c0_129] : memref<32x128xf32, #tpu.memory_space<vmem>>, vector<32x128xf32>
    %cst_130 = arith.constant dense<0.000000e+00> : vector<8x128xf32>
    %441 = tpu.matmul %433, %440, %cst_130 {dimension_numbers = #tpu.dot_dimension_numbers<[1], [0], [0], [1], [0, 0, 1, 1], [], []>} : vector<8x32xf32>, vector<32x128xf32>, vector<8x128xf32> -> vector<8x128xf32>
    %442 = arith.addf %436, %441 : vector<8x128xf32>
    %443 = vector.extract_strided_slice %439 {offsets = [0, 0], sizes = [8, 32], strides = [1, 1]} : vector<8x128xf32> to vector<8x32xf32>
    %444 = arith.negf %443 : vector<8x32xf32>
    %445 = math.exp %444 : vector<8x32xf32>
    %cst_131 = arith.constant 1.000000e+00 : f32
    %446 = vector.broadcast %cst_131 : f32 to vector<8x32xf32>
    %447 = arith.addf %446, %445 : vector<8x32xf32>
    %448 = arith.divf %446, %447 : vector<8x32xf32>
    %449 = vector.extract_strided_slice %439 {offsets = [0, 32], sizes = [8, 32], strides = [1, 1]} : vector<8x128xf32> to vector<8x32xf32>
    %450 = arith.negf %449 : vector<8x32xf32>
    %451 = math.exp %450 : vector<8x32xf32>
    %cst_132 = arith.constant 1.000000e+00 : f32
    %452 = vector.broadcast %cst_132 : f32 to vector<8x32xf32>
    %453 = arith.addf %452, %451 : vector<8x32xf32>
    %454 = arith.divf %452, %453 : vector<8x32xf32>
    %455 = vector.extract_strided_slice %439 {offsets = [0, 64], sizes = [8, 32], strides = [1, 1]} : vector<8x128xf32> to vector<8x32xf32>
    %456 = math.tanh %455 : vector<8x32xf32>
    %457 = vector.extract_strided_slice %439 {offsets = [0, 96], sizes = [8, 32], strides = [1, 1]} : vector<8x128xf32> to vector<8x32xf32>
    %458 = arith.negf %457 : vector<8x32xf32>
    %459 = math.exp %458 : vector<8x32xf32>
    %cst_133 = arith.constant 1.000000e+00 : f32
    %460 = vector.broadcast %cst_133 : f32 to vector<8x32xf32>
    %461 = arith.addf %460, %459 : vector<8x32xf32>
    %462 = arith.divf %460, %461 : vector<8x32xf32>
    %463 = arith.mulf %454, %405 : vector<8x32xf32>
    %464 = arith.mulf %448, %456 : vector<8x32xf32>
    %465 = arith.addf %463, %464 : vector<8x32xf32>
    %466 = math.tanh %465 : vector<8x32xf32>
    %467 = arith.mulf %462, %466 : vector<8x32xf32>
    %468 = arith.maximumf %408, %467 : vector<8x32xf32>
    %469 = vector.extract_strided_slice %442 {offsets = [0, 0], sizes = [8, 32], strides = [1, 1]} : vector<8x128xf32> to vector<8x32xf32>
    %470 = arith.negf %469 : vector<8x32xf32>
    %471 = math.exp %470 : vector<8x32xf32>
    %cst_134 = arith.constant 1.000000e+00 : f32
    %472 = vector.broadcast %cst_134 : f32 to vector<8x32xf32>
    %473 = arith.addf %472, %471 : vector<8x32xf32>
    %474 = arith.divf %472, %473 : vector<8x32xf32>
    %475 = vector.extract_strided_slice %442 {offsets = [0, 32], sizes = [8, 32], strides = [1, 1]} : vector<8x128xf32> to vector<8x32xf32>
    %476 = arith.negf %475 : vector<8x32xf32>
    %477 = math.exp %476 : vector<8x32xf32>
    %cst_135 = arith.constant 1.000000e+00 : f32
    %478 = vector.broadcast %cst_135 : f32 to vector<8x32xf32>
    %479 = arith.addf %478, %477 : vector<8x32xf32>
    %480 = arith.divf %478, %479 : vector<8x32xf32>
    %481 = vector.extract_strided_slice %442 {offsets = [0, 64], sizes = [8, 32], strides = [1, 1]} : vector<8x128xf32> to vector<8x32xf32>
    %482 = math.tanh %481 : vector<8x32xf32>
    %483 = vector.extract_strided_slice %442 {offsets = [0, 96], sizes = [8, 32], strides = [1, 1]} : vector<8x128xf32> to vector<8x32xf32>
    %484 = arith.negf %483 : vector<8x32xf32>
    %485 = math.exp %484 : vector<8x32xf32>
    %cst_136 = arith.constant 1.000000e+00 : f32
    %486 = vector.broadcast %cst_136 : f32 to vector<8x32xf32>
    %487 = arith.addf %486, %485 : vector<8x32xf32>
    %488 = arith.divf %486, %487 : vector<8x32xf32>
    %489 = arith.mulf %480, %431 : vector<8x32xf32>
    %490 = arith.mulf %474, %482 : vector<8x32xf32>
    %491 = arith.addf %489, %490 : vector<8x32xf32>
    %492 = math.tanh %491 : vector<8x32xf32>
    %493 = arith.mulf %488, %492 : vector<8x32xf32>
    %494 = arith.maximumf %434, %493 : vector<8x32xf32>
    %495 = vector.extract_strided_slice %468 {offsets = [0, 0], sizes = [8, 16], strides = [1, 1]} : vector<8x32xf32> to vector<8x16xf32>
    %c0_137 = arith.constant 0 : index
    %c0_138 = arith.constant 0 : index
    %496 = vector.load %arg10[%c0_137, %c0_138] : memref<8x32xf32, #tpu.memory_space<vmem>>, vector<8x16xf32>
    tpu.vector_store %arg10[%c0_137, %c0_138], %495 {strides = array<i32>} : memref<8x32xf32, #tpu.memory_space<vmem>>, vector<8x16xf32>,
    %497 = vector.extract_strided_slice %494 {offsets = [0, 0], sizes = [8, 16], strides = [1, 1]} : vector<8x32xf32> to vector<8x16xf32>
    %c0_139 = arith.constant 0 : index
    %c16_140 = arith.constant 16 : index
    %498 = vector.load %arg10[%c0_139, %c16_140] : memref<8x32xf32, #tpu.memory_space<vmem>>, vector<8x16xf32>
    tpu.vector_store %arg10[%c0_139, %c16_140], %497 {strides = array<i32>} : memref<8x32xf32, #tpu.memory_space<vmem>>, vector<8x16xf32>,
    %499 = vector.extract_strided_slice %468 {offsets = [0, 0], sizes = [8, 16], strides = [1, 1]} : vector<8x32xf32> to vector<8x16xf32>
    %c0_141 = arith.constant 0 : index
    %c0_142 = arith.constant 0 : index
    %500 = vector.load %arg13[%c0_141, %c0_142] : memref<8x64xf32, #tpu.memory_space<vmem>>, vector<8x16xf32>
    tpu.vector_store %arg13[%c0_141, %c0_142], %499 {strides = array<i32>} : memref<8x64xf32, #tpu.memory_space<vmem>>, vector<8x16xf32>,
    %501 = vector.extract_strided_slice %494 {offsets = [0, 0], sizes = [8, 16], strides = [1, 1]} : vector<8x32xf32> to vector<8x16xf32>
    %c0_143 = arith.constant 0 : index
    %c16_144 = arith.constant 16 : index
    %502 = vector.load %arg13[%c0_143, %c16_144] : memref<8x64xf32, #tpu.memory_space<vmem>>, vector<8x16xf32>
    tpu.vector_store %arg13[%c0_143, %c16_144], %501 {strides = array<i32>} : memref<8x64xf32, #tpu.memory_space<vmem>>, vector<8x16xf32>,
    %503 = vector.extract_strided_slice %468 {offsets = [0, 16], sizes = [8, 16], strides = [1, 1]} : vector<8x32xf32> to vector<8x16xf32>
    %c0_145 = arith.constant 0 : index
    %c32_146 = arith.constant 32 : index
    %504 = vector.load %arg13[%c0_145, %c32_146] : memref<8x64xf32, #tpu.memory_space<vmem>>, vector<8x16xf32>
    tpu.vector_store %arg13[%c0_145, %c32_146], %503 {strides = array<i32>} : memref<8x64xf32, #tpu.memory_space<vmem>>, vector<8x16xf32>,
    %505 = vector.extract_strided_slice %494 {offsets = [0, 16], sizes = [8, 16], strides = [1, 1]} : vector<8x32xf32> to vector<8x16xf32>
    %c0_147 = arith.constant 0 : index
    %c48_148 = arith.constant 48 : index
    %506 = vector.load %arg13[%c0_147, %c48_148] : memref<8x64xf32, #tpu.memory_space<vmem>>, vector<8x16xf32>
    tpu.vector_store %arg13[%c0_147, %c48_148], %505 {strides = array<i32>} : memref<8x64xf32, #tpu.memory_space<vmem>>, vector<8x16xf32>,
    %c0_149 = arith.constant 0 : index
    %c0_150 = arith.constant 0 : index
    %507 = vector.load %arg13[%c0_149, %c0_150] : memref<8x64xf32, #tpu.memory_space<vmem>>, vector<8x64xf32>
    %c0_151 = arith.constant 0 : index
    %c0_152 = arith.constant 0 : index
    %508 = vector.load %arg7[%c0_151, %c0_152] : memref<64x8xf32, #tpu.memory_space<vmem>>, vector<64x8xf32>
    %cst_153 = arith.constant dense<0.000000e+00> : vector<8x8xf32>
    %509 = tpu.matmul %507, %508, %cst_153 {dimension_numbers = #tpu.dot_dimension_numbers<[1], [0], [0], [1], [0, 0, 1, 1], [], []>} : vector<8x64xf32>, vector<64x8xf32>, vector<8x8xf32> -> vector<8x8xf32>
    %c0_154 = arith.constant 0 : index
    %c0_155 = arith.constant 0 : index
    %510 = vector.load %arg8[%c0_154, %c0_155] : memref<1x8xf32, #tpu.memory_space<vmem>>, vector<1x8xf32>
    %511 = vector.broadcast %510 : vector<1x8xf32> to vector<8x8xf32>
    %512 = arith.addf %509, %511 : vector<8x8xf32>
    %c0_156 = arith.constant 0 : index
    %c0_157 = arith.constant 0 : index
    %513 = vector.load %arg9[%c0_156, %c0_157] : memref<8x8xf32, #tpu.memory_space<vmem>>, vector<8x8xf32>
    tpu.vector_store %arg9[%c0_156, %c0_157], %512 {strides = array<i32>} : memref<8x8xf32, #tpu.memory_space<vmem>>, vector<8x8xf32>,
    return
  }
}

</mosaic_0001>

<llo_original>
// kernel: tpu_custom_call.1
$region0: #{tpu_custom_call.1}
  #allocation0 [shape = 'u32[]', space=smem, size = 0x4, offset = 0x4, fixed_abs, tag = 'smem constant byte address 0x4 - core index']
  #allocation1 [shape = 'u32[144,128]{1,0:T(1,128)}', space=vmem, size = 0x12000, scoped, tag = 'internal scratch']
  #allocation2 [shape = 'f32[64,128]{1,0:T(8,128)}', space=vmem, size = 0x8000, scoped, tag = 'scratch operand']
  #allocation3 [shape = 'f32[64,128]{1,0:T(8,128)}', space=vmem, size = 0x8000, scoped, tag = 'scratch operand']
  #allocation4 [shape = 'f32[8,64]{1,0:T(8,128)}', space=vmem, size = 0x1000, scoped, tag = 'scratch operand']
  %s0 = inlined_call_operand.vmem [shape: f32[64,32], index: 0, kind: input, shape index: {}]
  %s1 = inlined_call_operand.vmem [shape: f32[32,128], index: 1, kind: input, shape index: {}]
  %s2 = inlined_call_operand.vmem [shape: f32[32,128], index: 2, kind: input, shape index: {}]
  %s3 = inlined_call_operand.vmem [shape: f32[1,128], index: 3, kind: input, shape index: {}]
  %s4 = inlined_call_operand.vmem [shape: f32[32,128], index: 4, kind: input, shape index: {}]
  %s5 = inlined_call_operand.vmem [shape: f32[32,128], index: 5, kind: input, shape index: {}]
  %s6 = inlined_call_operand.vmem [shape: f32[1,128], index: 6, kind: input, shape index: {}]
  %s7 = inlined_call_operand.vmem [shape: f32[64,8], index: 7, kind: input, shape index: {}]
  %s8 = inlined_call_operand.vmem [shape: f32[1,8], index: 8, kind: input, shape index: {}]
  %s9 = inlined_call_operand.hbm [shape: f32[8,8], index: 9, kind: output, shape index: {0}]
  %s10 = inlined_call_operand.hbm [shape: f32[8,32], index: 10, kind: output, shape index: {1}]
  %11 = xla_tuple %s9, %s10
  %s12 = sld [smem:[#allocation0]]
  $region54: #{tpu_custom_call.1} parent=0
    _
  %s14 = ssub.s32 1, %s12
  %s15 = scalar_select 0, %s14, %s12
  $region1: #{tpu_custom_call.1} parent=0
    #allocation5 [shape = 'u8[4096]{0}', space=vmem, size = 0x1000, scoped, tag = 'output window, operand 0, single buffered']
    #allocation6 [shape = 's32[1]{0}', space=sflag, size = 0x4, scoped, tag = 'scoped memory for tpu_custom_call.1']
    #allocation7 [shape = 'u8[4096]{0}', space=vmem, size = 0x1000, scoped, tag = 'output window, operand 1, single buffered']
    #allocation8 [shape = 's32[1]{0}', space=sflag, size = 0x4, scoped, tag = 'scoped memory for tpu_custom_call.1']
    %16 = vsyncpa [#allocation6], 0
    %17 = vsyncpa [#allocation8], 0
    // Predicated region
    $region2: #{tpu_custom_call.1} parent=1 // pred_check
      _
    $region3: #{tpu_custom_call.1} parent=1 // pred_check_branch
      %19 = sbr.rel (0) target = $region5
    $region4: #{tpu_custom_call.1} parent=1 // pred_region
      _
    $region5: #{tpu_custom_call.1} parent=1 // pred_fallthru
      _
    // Predicated region
    $region6: #{tpu_custom_call.1} parent=1 // pred_check
      _
    $region7: #{tpu_custom_call.1} parent=1 // pred_check_branch
      %21 = sbr.rel (0) target = $region9
    $region8: #{tpu_custom_call.1} parent=1 // pred_region
      _
    $region9: #{tpu_custom_call.1} parent=1 // pred_fallthru
      _
    // Predicated region
    $region10: #{tpu_custom_call.1} parent=1 // pred_check
      _
    $region11: #{tpu_custom_call.1} parent=1 // pred_check_branch
      %23 = sbr.rel (0) target = $region13
    $region12: #{tpu_custom_call.1} parent=1 // pred_region
      _
    $region13: #{tpu_custom_call.1} parent=1 // pred_fallthru
      _
    // Predicated region
    $region14: #{tpu_custom_call.1} parent=1 // pred_check
      _
    $region15: #{tpu_custom_call.1} parent=1 // pred_check_branch
      %25 = sbr.rel (0) target = $region17
    $region16: #{tpu_custom_call.1} parent=1 // pred_region
      _
    $region17: #{tpu_custom_call.1} parent=1 // pred_fallthru
      _
    // Predicated region
    $region18: #{tpu_custom_call.1} parent=1 // pred_check
      _
    $region19: #{tpu_custom_call.1} parent=1 // pred_check_branch
      %27 = sbr.rel (0) target = $region21
    $region20: #{tpu_custom_call.1} parent=1 // pred_region
      _
    $region21: #{tpu_custom_call.1} parent=1 // pred_fallthru
      _
    // Predicated region
    $region22: #{tpu_custom_call.1} parent=1 // pred_check
      _
    $region23: #{tpu_custom_call.1} parent=1 // pred_check_branch
      %29 = sbr.rel (0) target = $region25
    $region24: #{tpu_custom_call.1} parent=1 // pred_region
      _
    $region25: #{tpu_custom_call.1} parent=1 // pred_fallthru
      _
    // Predicated region
    $region26: #{tpu_custom_call.1} parent=1 // pred_check
      _
    $region27: #{tpu_custom_call.1} parent=1 // pred_check_branch
      %31 = sbr.rel (0) target = $region29
    $region28: #{tpu_custom_call.1} parent=1 // pred_region
      _
    $region29: #{tpu_custom_call.1} parent=1 // pred_fallthru
      _
    // Predicated region
    $region30: #{tpu_custom_call.1} parent=1 // pred_check
      _
    $region31: #{tpu_custom_call.1} parent=1 // pred_check_branch
      %33 = sbr.rel (0) target = $region33
    $region32: #{tpu_custom_call.1} parent=1 // pred_region
      _
    $region33: #{tpu_custom_call.1} parent=1 // pred_fallthru
      _
    // Predicated region
    $region34: #{tpu_custom_call.1} parent=1 // pred_check
      _
    $region35: #{tpu_custom_call.1} parent=1 // pred_check_branch
      %35 = sbr.rel (0) target = $region37
    $region36: #{tpu_custom_call.1} parent=1 // pred_region
      _
    $region37: #{tpu_custom_call.1} parent=1 // pred_fallthru
      _
    %v36 = vld [vmem:[%s0] sm:$0xff]
    %v37 = vld [vmem:[%s0 + $0x8] sm:$0xff]
    %v38 = vld [vmem:[%s0 + $0x10] sm:$0xff]
    %v39 = vld [vmem:[%s0 + $0x18] sm:$0xff]
    %v40 = vld [vmem:[%s0 + $0x20] sm:$0xff]
    %v41 = vld [vmem:[%s0 + $0x28] sm:$0xff]
    %v42 = vld [vmem:[%s0 + $0x30] sm:$0xff]
    %v43 = vld [vmem:[%s0 + $0x38] sm:$0xff]
    %v44 = vld [vmem:[%s1] sm:$0xff]
    %v45 = vld [vmem:[%s1 + $0x8] sm:$0xff]
    %v46 = vld [vmem:[%s1 + $0x10] sm:$0xff]
    %v47 = vld [vmem:[%s1 + $0x18] sm:$0xff]
    %v48 = vld [vmem:[%s3] sm:$0x1]
    %v50 = vlaneseq
    %v51 = vshrl.u32 %v50, 7
    %v52 = vsub.s32 0, %v51
    %v53 = vrot.slane %v48, %v52
    %vm55 = vcmask 261120
    %v57 = vsel %vm55, %v36, 0
    %v60 = vsel %vm55, %v37, 0
    %v63 = vsel %vm55, %v38, 0
    %v66 = vsel %vm55, %v39, 0
    %v69 = vsel %vm55, %v40, 0
    %v72 = vsel %vm55, %v41, 0
    %v75 = vsel %vm55, %v42, 0
    %v78 = vsel %vm55, %v43, 0
    %80 = vmatprep.subr.mxu0 0.0
    %81 = vmatpush1.msra.mxu0 %v44
    %82 = vmatprep.subr.mxu0 0.0
    %83 = vmatpush1.msra.mxu0 %v45
    %84 = vmatprep.subr.mxu0 0.0
    %85 = vmatpush1.msra.mxu0 %v46
    %86 = vmatprep.subr.mxu0 0.0
    %87 = vmatpush1.msra.mxu0 %v47
    %88 = vmatprep.subr.mxu0 0.0
    %89 = vmatpush1.msra.mxu0 0.0
    %90 = vmatprep.subr.mxu0 0.0
    %91 = vmatpush1.msra.mxu0 0.0
    %92 = vmatprep.subr.mxu0 0.0
    %93 = vmatpush1.msra.mxu0 0.0
    %94 = vmatprep.subr.mxu0 0.0
    %95 = vmatpush1.msra.mxu0 0.0
    %96 = vmatprep.subr.mxu0 0.0
    %97 = vmatpush1.msra.mxu0 0.0
    %98 = vmatprep.subr.mxu0 0.0
    %99 = vmatpush1.msra.mxu0 0.0
    %100 = vmatprep.subr.mxu0 0.0
    %101 = vmatpush1.msra.mxu0 0.0
    %102 = vmatprep.subr.mxu0 0.0
    %103 = vmatpush1.msra.mxu0 0.0
    %104 = vmatprep.subr.mxu0 0.0
    %105 = vmatpush1.msra.mxu0 0.0
    %106 = vmatprep.subr.mxu0 0.0
    %107 = vmatpush1.msra.mxu0 0.0
    %108 = vmatprep.subr.mxu0 0.0
    %109 = vmatpush1.msra.mxu0 0.0
    %110 = vmatprep.subr.mxu0 0.0
    %111 = vmatpush1.msra.mxu0 0.0
    %112 = vmatprep.subr.mxu0 0.0
    %113 = vmatpush1.msra.mxu0 0.0
    %114 = vmatprep.subr.mxu0 0.0
    %115 = vmatpush1.msra.mxu0 0.0
    %116 = vmatprep.subr.mxu0 0.0
    %117 = vmatpush1.msra.mxu0 0.0
    %118 = vmatprep.subr.mxu0 0.0
    %119 = vmatpush1.msra.mxu0 0.0
    %120 = vmatprep.subr.mxu0 0.0
    %121 = vmatpush1.msra.mxu0 0.0
    %122 = vmatprep.subr.mxu0 0.0
    %123 = vmatpush1.msra.mxu0 0.0
    %124 = vmatprep.subr.mxu0 0.0
    %125 = vmatpush1.msra.mxu0 0.0
    %126 = vmatprep.subr.mxu0 0.0
    %127 = vmatpush1.msra.mxu0 0.0
    %128 = vmatprep.subr.mxu0 0.0
    %129 = vmatpush1.msra.mxu0 0.0
    %130 = vmatprep.subr.mxu0 0.0
    %131 = vmatpush1.msra.mxu0 0.0
    %132 = vmatprep.subr.mxu0 0.0
    %133 = vmatpush1.msra.mxu0 0.0
    %134 = vmatprep.subr.mxu0 0.0
    %135 = vmatpush1.msra.mxu0 0.0
    %136 = vmatprep.subr.mxu0 0.0
    %137 = vmatpush1.msra.mxu0 0.0
    %138 = vmatprep.subr.mxu0 0.0
    %139 = vmatpush1.msra.mxu0 0.0
    %140 = vmatprep.subr.mxu0 0.0
    %141 = vmatpush1.msra.mxu0 0.0
    %142 = vmatprep.subr.mxu0 0.0
    %143 = vmatpush1.msra.mxu0 0.0
    %144 = vmatprep.mubr.f32.mxu0 0.0
    %145 = vmatmul.mubr.f32.gmra.mrb[0].mxu0 %v57
    %v146 = vpop.f32.mrb[0].mxu0
    %v147 = vadd.f32 %v53, %v146
    %v148 = vpop.f32.mrb[0].mxu0
    %149 = vmatprep.mubr.f32.mxu0 0.0
    %150 = vmatmul.mubr.f32.gmra.mrb[0].mxu0 %v60
    %v151 = vpop.f32.mrb[0].mxu0
    %v152 = vadd.f32 %v53, %v151
    %v153 = vpop.f32.mrb[0].mxu0
    %154 = vmatprep.mubr.f32.mxu0 0.0
    %155 = vmatmul.mubr.f32.gmra.mrb[0].mxu0 %v63
    %v156 = vpop.f32.mrb[0].mxu0
    %v157 = vadd.f32 %v53, %v156
    %v158 = vpop.f32.mrb[0].mxu0
    %159 = vmatprep.mubr.f32.mxu0 0.0
    %160 = vmatmul.mubr.f32.gmra.mrb[0].mxu0 %v66
    %v161 = vpop.f32.mrb[0].mxu0
    %v162 = vadd.f32 %v53, %v161
    %v163 = vpop.f32.mrb[0].mxu0
    %164 = vmatprep.mubr.f32.mxu0 0.0
    %165 = vmatmul.mubr.f32.gmra.mrb[0].mxu0 %v69
    %v166 = vpop.f32.mrb[0].mxu0
    %v167 = vadd.f32 %v53, %v166
    %v168 = vpop.f32.mrb[0].mxu0
    %169 = vmatprep.mubr.f32.mxu0 0.0
    %170 = vmatmul.mubr.f32.gmra.mrb[0].mxu0 %v72
    %v171 = vpop.f32.mrb[0].mxu0
    %v172 = vadd.f32 %v53, %v171
    %v173 = vpop.f32.mrb[0].mxu0
    %174 = vmatprep.mubr.f32.mxu0 0.0
    %175 = vmatmul.mubr.f32.gmra.mrb[0].mxu0 %v75
    %v176 = vpop.f32.mrb[0].mxu0
    %v177 = vadd.f32 %v53, %v176
    %v178 = vpop.f32.mrb[0].mxu0
    %179 = vmatprep.mubr.f32.mxu0 0.0
    %180 = vmatmul.mubr.f32.gmra.mrb[0].mxu0 %v78
    %v181 = vpop.f32.mrb[0].mxu0
    %v182 = vadd.f32 %v53, %v181
    %v183 = vpop.f32.mrb[0].mxu0
    %184 = vdwg.mxu0
    %185 = vst [vmem:[#allocation2] sm:$0xff] %v147
    %186 = vst [vmem:[#allocation2 + $0x8] sm:$0xff] %v152
    %187 = vst [vmem:[#allocation2 + $0x10] sm:$0xff] %v157
    %188 = vst [vmem:[#allocation2 + $0x18] sm:$0xff] %v162
    %189 = vst [vmem:[#allocation2 + $0x20] sm:$0xff] %v167
    %190 = vst [vmem:[#allocation2 + $0x28] sm:$0xff] %v172
    %191 = vst [vmem:[#allocation2 + $0x30] sm:$0xff] %v177
    %192 = vst [vmem:[#allocation2 + $0x38] sm:$0xff] %v182
    %v193 = vld [vmem:[%s4] sm:$0xff]
    %v194 = vld [vmem:[%s4 + $0x8] sm:$0xff]
    %v195 = vld [vmem:[%s4 + $0x10] sm:$0xff]
    %v196 = vld [vmem:[%s4 + $0x18] sm:$0xff]
    %v197 = vld [vmem:[%s6] sm:$0x1]
    %v199 = vlaneseq
    %v200 = vshrl.u32 %v199, 7
    %v201 = vsub.s32 0, %v200
    %v202 = vrot.slane %v197, %v201
    %204 = vmatprep.subr.mxu0 0.0
    %205 = vmatpush1.msra.mxu0 %v193
    %206 = vmatprep.subr.mxu0 0.0
    %207 = vmatpush1.msra.mxu0 %v194
    %208 = vmatprep.subr.mxu0 0.0
    %209 = vmatpush1.msra.mxu0 %v195
    %210 = vmatprep.subr.mxu0 0.0
    %211 = vmatpush1.msra.mxu0 %v196
    %212 = vmatprep.subr.mxu0 0.0
    %213 = vmatpush1.msra.mxu0 0.0
    %214 = vmatprep.subr.mxu0 0.0
    %215 = vmatpush1.msra.mxu0 0.0
    %216 = vmatprep.subr.mxu0 0.0
    %217 = vmatpush1.msra.mxu0 0.0
    %218 = vmatprep.subr.mxu0 0.0
    %219 = vmatpush1.msra.mxu0 0.0
    %220 = vmatprep.subr.mxu0 0.0
    %221 = vmatpush1.msra.mxu0 0.0
    %222 = vmatprep.subr.mxu0 0.0
    %223 = vmatpush1.msra.mxu0 0.0
    %224 = vmatprep.subr.mxu0 0.0
    %225 = vmatpush1.msra.mxu0 0.0
    %226 = vmatprep.subr.mxu0 0.0
    %227 = vmatpush1.msra.mxu0 0.0
    %228 = vmatprep.subr.mxu0 0.0
    %229 = vmatpush1.msra.mxu0 0.0
    %230 = vmatprep.subr.mxu0 0.0
    %231 = vmatpush1.msra.mxu0 0.0
    %232 = vmatprep.subr.mxu0 0.0
    %233 = vmatpush1.msra.mxu0 0.0
    %234 = vmatprep.subr.mxu0 0.0
    %235 = vmatpush1.msra.mxu0 0.0
    %236 = vmatprep.subr.mxu0 0.0
    %237 = vmatpush1.msra.mxu0 0.0
    %238 = vmatprep.subr.mxu0 0.0
    %239 = vmatpush1.msra.mxu0 0.0
    %240 = vmatprep.subr.mxu0 0.0
    %241 = vmatpush1.msra.mxu0 0.0
    %242 = vmatprep.subr.mxu0 0.0
    %243 = vmatpush1.msra.mxu0 0.0
    %244 = vmatprep.subr.mxu0 0.0
    %245 = vmatpush1.msra.mxu0 0.0
    %246 = vmatprep.subr.mxu0 0.0
    %247 = vmatpush1.msra.mxu0 0.0
    %248 = vmatprep.subr.mxu0 0.0
    %249 = vmatpush1.msra.mxu0 0.0
    %250 = vmatprep.subr.mxu0 0.0
    %251 = vmatpush1.msra.mxu0 0.0
    %252 = vmatprep.subr.mxu0 0.0
    %253 = vmatpush1.msra.mxu0 0.0
    %254 = vmatprep.subr.mxu0 0.0
    %255 = vmatpush1.msra.mxu0 0.0
    %256 = vmatprep.subr.mxu0 0.0
    %257 = vmatpush1.msra.mxu0 0.0
    %258 = vmatprep.subr.mxu0 0.0
    %259 = vmatpush1.msra.mxu0 0.0
    %260 = vmatprep.subr.mxu0 0.0
    %261 = vmatpush1.msra.mxu0 0.0
    %262 = vmatprep.subr.mxu0 0.0
    %263 = vmatpush1.msra.mxu0 0.0
    %264 = vmatprep.subr.mxu0 0.0
    %265 = vmatpush1.msra.mxu0 0.0
    %266 = vmatprep.subr.mxu0 0.0
    %267 = vmatpush1.msra.mxu0 0.0
    %268 = vmatprep.mubr.f32.mxu0 0.0
    %269 = vmatmul.mubr.f32.gmra.mrb[0].mxu0 %v57
    %v270 = vpop.f32.mrb[0].mxu0
    %v271 = vadd.f32 %v202, %v270
    %v272 = vpop.f32.mrb[0].mxu0
    %273 = vmatprep.mubr.f32.mxu0 0.0
    %274 = vmatmul.mubr.f32.gmra.mrb[0].mxu0 %v60
    %v275 = vpop.f32.mrb[0].mxu0
    %v276 = vadd.f32 %v202, %v275
    %v277 = vpop.f32.mrb[0].mxu0
    %278 = vmatprep.mubr.f32.mxu0 0.0
    %279 = vmatmul.mubr.f32.gmra.mrb[0].mxu0 %v63
    %v280 = vpop.f32.mrb[0].mxu0
    %v281 = vadd.f32 %v202, %v280
    %v282 = vpop.f32.mrb[0].mxu0
    %283 = vmatprep.mubr.f32.mxu0 0.0
    %284 = vmatmul.mubr.f32.gmra.mrb[0].mxu0 %v66
    %v285 = vpop.f32.mrb[0].mxu0
    %v286 = vadd.f32 %v202, %v285
    %v287 = vpop.f32.mrb[0].mxu0
    %288 = vmatprep.mubr.f32.mxu0 0.0
    %289 = vmatmul.mubr.f32.gmra.mrb[0].mxu0 %v69
    %v290 = vpop.f32.mrb[0].mxu0
    %v291 = vadd.f32 %v202, %v290
    %v292 = vpop.f32.mrb[0].mxu0
    %293 = vmatprep.mubr.f32.mxu0 0.0
    %294 = vmatmul.mubr.f32.gmra.mrb[0].mxu0 %v72
    %v295 = vpop.f32.mrb[0].mxu0
    %v296 = vadd.f32 %v202, %v295
    %v297 = vpop.f32.mrb[0].mxu0
    %298 = vmatprep.mubr.f32.mxu0 0.0
    %299 = vmatmul.mubr.f32.gmra.mrb[0].mxu0 %v75
    %v300 = vpop.f32.mrb[0].mxu0
    %v301 = vadd.f32 %v202, %v300
    %v302 = vpop.f32.mrb[0].mxu0
    %303 = vmatprep.mubr.f32.mxu0 0.0
    %304 = vmatmul.mubr.f32.gmra.mrb[0].mxu0 %v78
    %v305 = vpop.f32.mrb[0].mxu0
    %v306 = vadd.f32 %v202, %v305
    %v307 = vpop.f32.mrb[0].mxu0
    %308 = vdwg.mxu0
    %309 = vst [vmem:[#allocation3] sm:$0xff] %v271
    %310 = vst [vmem:[#allocation3 + $0x8] sm:$0xff] %v276
    %311 = vst [vmem:[#allocation3 + $0x10] sm:$0xff] %v281
    %312 = vst [vmem:[#allocation3 + $0x18] sm:$0xff] %v286
    %313 = vst [vmem:[#allocation3 + $0x20] sm:$0xff] %v291
    %314 = vst [vmem:[#allocation3 + $0x28] sm:$0xff] %v296
    %315 = vst [vmem:[#allocation3 + $0x30] sm:$0xff] %v301
    %316 = vst [vmem:[#allocation3 + $0x38] sm:$0xff] %v306
    %v317 = vld [vmem:[#allocation2] sm:$0xff]
    %v318 = vld [vmem:[#allocation3 + $0x38] sm:$0xff]
    %v319 = vld [vmem:[%s2] sm:$0xff]
    %v320 = vld [vmem:[%s2 + $0x8] sm:$0xff]
    %v321 = vld [vmem:[%s2 + $0x10] sm:$0xff]
    %v322 = vld [vmem:[%s2 + $0x18] sm:$0xff]
    %v324 = vsel %vm55, 0.0, 0
    %326 = vmatprep.subr.mxu0 0.0
    %327 = vmatpush1.msra.mxu0 %v319
    %328 = vmatprep.subr.mxu0 0.0
    %329 = vmatpush1.msra.mxu0 %v320
    %330 = vmatprep.subr.mxu0 0.0
    %331 = vmatpush1.msra.mxu0 %v321
    %332 = vmatprep.subr.mxu0 0.0
    %333 = vmatpush1.msra.mxu0 %v322
    %334 = vmatprep.subr.mxu0 0.0
    %335 = vmatpush1.msra.mxu0 0.0
    %336 = vmatprep.subr.mxu0 0.0
    %337 = vmatpush1.msra.mxu0 0.0
    %338 = vmatprep.subr.mxu0 0.0
    %339 = vmatpush1.msra.mxu0 0.0
    %340 = vmatprep.subr.mxu0 0.0
    %341 = vmatpush1.msra.mxu0 0.0
    %342 = vmatprep.subr.mxu0 0.0
    %343 = vmatpush1.msra.mxu0 0.0
    %344 = vmatprep.subr.mxu0 0.0
    %345 = vmatpush1.msra.mxu0 0.0
    %346 = vmatprep.subr.mxu0 0.0
    %347 = vmatpush1.msra.mxu0 0.0
    %348 = vmatprep.subr.mxu0 0.0
    %349 = vmatpush1.msra.mxu0 0.0
    %350 = vmatprep.subr.mxu0 0.0
    %351 = vmatpush1.msra.mxu0 0.0
    %352 = vmatprep.subr.mxu0 0.0
    %353 = vmatpush1.msra.mxu0 0.0
    %354 = vmatprep.subr.mxu0 0.0
    %355 = vmatpush1.msra.mxu0 0.0
    %356 = vmatprep.subr.mxu0 0.0
    %357 = vmatpush1.msra.mxu0 0.0
    %358 = vmatprep.subr.mxu0 0.0
    %359 = vmatpush1.msra.mxu0 0.0
    %360 = vmatprep.subr.mxu0 0.0
    %361 = vmatpush1.msra.mxu0 0.0
    %362 = vmatprep.subr.mxu0 0.0
    %363 = vmatpush1.msra.mxu0 0.0
    %364 = vmatprep.subr.mxu0 0.0
    %365 = vmatpush1.msra.mxu0 0.0
    %366 = vmatprep.subr.mxu0 0.0
    %367 = vmatpush1.msra.mxu0 0.0
    %368 = vmatprep.subr.mxu0 0.0
    %369 = vmatpush1.msra.mxu0 0.0
    %370 = vmatprep.subr.mxu0 0.0
    %371 = vmatpush1.msra.mxu0 0.0
    %372 = vmatprep.subr.mxu0 0.0
    %373 = vmatpush1.msra.mxu0 0.0
    %374 = vmatprep.subr.mxu0 0.0
    %375 = vmatpush1.msra.mxu0 0.0
    %376 = vmatprep.subr.mxu0 0.0
    %377 = vmatpush1.msra.mxu0 0.0
    %378 = vmatprep.subr.mxu0 0.0
    %379 = vmatpush1.msra.mxu0 0.0
    %380 = vmatprep.subr.mxu0 0.0
    %381 = vmatpush1.msra.mxu0 0.0
    %382 = vmatprep.subr.mxu0 0.0
    %383 = vmatpush1.msra.mxu0 0.0
    %384 = vmatprep.subr.mxu0 0.0
    %385 = vmatpush1.msra.mxu0 0.0
    %386 = vmatprep.subr.mxu0 0.0
    %387 = vmatpush1.msra.mxu0 0.0
    %388 = vmatprep.subr.mxu0 0.0
    %389 = vmatpush1.msra.mxu0 0.0
    %390 = vmatprep.mubr.f32.mxu0 0.0
    %391 = vmatmul.mubr.f32.gmra.mrb[0].mxu0 %v324
    %v392 = vpop.f32.mrb[0].mxu0
    %v393 = vadd.f32 0.0, %v392
    %v394 = vpop.f32.mrb[0].mxu0
    %395 = vdwg.mxu0
    %v396 = vadd.f32 %v317, %v393
    %v397 = vld [vmem:[%s5] sm:$0xff]
    %v398 = vld [vmem:[%s5 + $0x8] sm:$0xff]
    %v399 = vld [vmem:[%s5 + $0x10] sm:$0xff]
    %v400 = vld [vmem:[%s5 + $0x18] sm:$0xff]
    %401 = vmatprep.subr.mxu0 0.0
    %402 = vmatpush1.msra.mxu0 %v397
    %403 = vmatprep.subr.mxu0 0.0
    %404 = vmatpush1.msra.mxu0 %v398
    %405 = vmatprep.subr.mxu0 0.0
    %406 = vmatpush1.msra.mxu0 %v399
    %407 = vmatprep.subr.mxu0 0.0
    %408 = vmatpush1.msra.mxu0 %v400
    %409 = vmatprep.subr.mxu0 0.0
    %410 = vmatpush1.msra.mxu0 0.0
    %411 = vmatprep.subr.mxu0 0.0
    %412 = vmatpush1.msra.mxu0 0.0
    %413 = vmatprep.subr.mxu0 0.0
    %414 = vmatpush1.msra.mxu0 0.0
    %415 = vmatprep.subr.mxu0 0.0
    %416 = vmatpush1.msra.mxu0 0.0
    %417 = vmatprep.subr.mxu0 0.0
    %418 = vmatpush1.msra.mxu0 0.0
    %419 = vmatprep.subr.mxu0 0.0
    %420 = vmatpush1.msra.mxu0 0.0
    %421 = vmatprep.subr.mxu0 0.0
    %422 = vmatpush1.msra.mxu0 0.0
    %423 = vmatprep.subr.mxu0 0.0
    %424 = vmatpush1.msra.mxu0 0.0
    %425 = vmatprep.subr.mxu0 0.0
    %426 = vmatpush1.msra.mxu0 0.0
    %427 = vmatprep.subr.mxu0 0.0
    %428 = vmatpush1.msra.mxu0 0.0
    %429 = vmatprep.subr.mxu0 0.0
    %430 = vmatpush1.msra.mxu0 0.0
    %431 = vmatprep.subr.mxu0 0.0
    %432 = vmatpush1.msra.mxu0 0.0
    %433 = vmatprep.subr.mxu0 0.0
    %434 = vmatpush1.msra.mxu0 0.0
    %435 = vmatprep.subr.mxu0 0.0
    %436 = vmatpush1.msra.mxu0 0.0
    %437 = vmatprep.subr.mxu0 0.0
    %438 = vmatpush1.msra.mxu0 0.0
    %439 = vmatprep.subr.mxu0 0.0
    %440 = vmatpush1.msra.mxu0 0.0
    %441 = vmatprep.subr.mxu0 0.0
    %442 = vmatpush1.msra.mxu0 0.0
    %443 = vmatprep.subr.mxu0 0.0
    %444 = vmatpush1.msra.mxu0 0.0
    %445 = vmatprep.subr.mxu0 0.0
    %446 = vmatpush1.msra.mxu0 0.0
    %447 = vmatprep.subr.mxu0 0.0
    %448 = vmatpush1.msra.mxu0 0.0
    %449 = vmatprep.subr.mxu0 0.0
    %450 = vmatpush1.msra.mxu0 0.0
    %451 = vmatprep.subr.mxu0 0.0
    %452 = vmatpush1.msra.mxu0 0.0
    %453 = vmatprep.subr.mxu0 0.0
    %454 = vmatpush1.msra.mxu0 0.0
    %455 = vmatprep.subr.mxu0 0.0
    %456 = vmatpush1.msra.mxu0 0.0
    %457 = vmatprep.subr.mxu0 0.0
    %458 = vmatpush1.msra.mxu0 0.0
    %459 = vmatprep.subr.mxu0 0.0
    %460 = vmatpush1.msra.mxu0 0.0
    %461 = vmatprep.subr.mxu0 0.0
    %462 = vmatpush1.msra.mxu0 0.0
    %463 = vmatprep.subr.mxu0 0.0
    %464 = vmatpush1.msra.mxu0 0.0
    %465 = vmatprep.mubr.f32.mxu0 0.0
    %466 = vmatmul.mubr.f32.gmra.mrb[0].mxu0 %v324
    %v467 = vpop.f32.mrb[0].mxu0
    %v468 = vadd.f32 0.0, %v467
    %v469 = vpop.f32.mrb[0].mxu0
    %470 = vdwg.mxu0
    %v471 = vadd.f32 %v318, %v468
    %v472 = vxor.u32 %v396, 2147483648
    %v473 = vmul.f32 %v472, 1.442695
    %v474 = vpow.pop %v473
    %v475 = vadd.f32 %v474, 1.0
    %v476 = vrcp.pop %v475
    %v477 = vmul.f32 1.0, %v476
    %v478 = vtanh.pop %v396
    %v479 = vmul.f32 %v477, 0.0
    %481 = vrot.lane.b32.xlu0 %v478, 64
    %v482 = vpop.permute.xlu0 %481
    %v484 = vmul.f32 %v477, %v482
    %486 = vrot.lane.b32.xlu0 %v484, 32
    %v487 = vpop.permute.xlu0 %486
    %v489 = vadd.f32 %v479, %v487
    %v490 = vtanh.pop %v489
    %492 = vrot.lane.b32.xlu0 %v490, 64
    %v493 = vpop.permute.xlu0 %492
    %v495 = vmul.f32 %v477, %v493
    %v496 = vxor.u32 %v471, 2147483648
    %v497 = vmul.f32 %v496, 1.442695
    %v498 = vpow.pop %v497
    %v499 = vadd.f32 %v498, 1.0
    %v500 = vrcp.pop %v499
    %v501 = vmul.f32 1.0, %v500
    %v502 = vtanh.pop %v471
    %v503 = vmul.f32 %v501, 0.0
    %505 = vrot.lane.b32.xlu0 %v502, 64
    %v506 = vpop.permute.xlu0 %505
    %v508 = vmul.f32 %v501, %v506
    %510 = vrot.lane.b32.xlu0 %v508, 32
    %v511 = vpop.permute.xlu0 %510
    %v513 = vadd.f32 %v503, %v511
    %v514 = vtanh.pop %v513
    %516 = vrot.lane.b32.xlu0 %v514, 64
    %v517 = vpop.permute.xlu0 %516
    %v519 = vmul.f32 %v501, %v517
    %v520 = vld [vmem:[#allocation2 + $0x8] sm:$0xff]
    %v521 = vld [vmem:[#allocation3 + $0x30] sm:$0xff]
    %523 = vrot.lane.b32.xlu0 %v495, 32
    %v524 = vpop.permute.xlu0 %523
    %v525 = vsel %vm55, %v524, 0
    %527 = vmatprep.subr.mxu0 0.0
    %528 = vmatpush1.msra.mxu0 %v319
    %529 = vmatprep.subr.mxu0 0.0
    %530 = vmatpush1.msra.mxu0 %v320
    %531 = vmatprep.subr.mxu0 0.0
    %532 = vmatpush1.msra.mxu0 %v321
    %533 = vmatprep.subr.mxu0 0.0
    %534 = vmatpush1.msra.mxu0 %v322
    %535 = vmatprep.subr.mxu0 0.0
    %536 = vmatpush1.msra.mxu0 0.0
    %537 = vmatprep.subr.mxu0 0.0
    %538 = vmatpush1.msra.mxu0 0.0
    %539 = vmatprep.subr.mxu0 0.0
    %540 = vmatpush1.msra.mxu0 0.0
    %541 = vmatprep.subr.mxu0 0.0
    %542 = vmatpush1.msra.mxu0 0.0
    %543 = vmatprep.subr.mxu0 0.0
    %544 = vmatpush1.msra.mxu0 0.0
    %545 = vmatprep.subr.mxu0 0.0
    %546 = vmatpush1.msra.mxu0 0.0
    %547 = vmatprep.subr.mxu0 0.0
    %548 = vmatpush1.msra.mxu0 0.0
    %549 = vmatprep.subr.mxu0 0.0
    %550 = vmatpush1.msra.mxu0 0.0
    %551 = vmatprep.subr.mxu0 0.0
    %552 = vmatpush1.msra.mxu0 0.0
    %553 = vmatprep.subr.mxu0 0.0
    %554 = vmatpush1.msra.mxu0 0.0
    %555 = vmatprep.subr.mxu0 0.0
    %556 = vmatpush1.msra.mxu0 0.0
    %557 = vmatprep.subr.mxu0 0.0
    %558 = vmatpush1.msra.mxu0 0.0
    %559 = vmatprep.subr.mxu0 0.0
    %560 = vmatpush1.msra.mxu0 0.0
    %561 = vmatprep.subr.mxu0 0.0
    %562 = vmatpush1.msra.mxu0 0.0
    %563 = vmatprep.subr.mxu0 0.0
    %564 = vmatpush1.msra.mxu0 0.0
    %565 = vmatprep.subr.mxu0 0.0
    %566 = vmatpush1.msra.mxu0 0.0
    %567 = vmatprep.subr.mxu0 0.0
    %568 = vmatpush1.msra.mxu0 0.0
    %569 = vmatprep.subr.mxu0 0.0
    %570 = vmatpush1.msra.mxu0 0.0
    %571 = vmatprep.subr.mxu0 0.0
    %572 = vmatpush1.msra.mxu0 0.0
    %573 = vmatprep.subr.mxu0 0.0
    %574 = vmatpush1.msra.mxu0 0.0
    %575 = vmatprep.subr.mxu0 0.0
    %576 = vmatpush1.msra.mxu0 0.0
    %577 = vmatprep.subr.mxu0 0.0
    %578 = vmatpush1.msra.mxu0 0.0
    %579 = vmatprep.subr.mxu0 0.0
    %580 = vmatpush1.msra.mxu0 0.0
    %581 = vmatprep.subr.mxu0 0.0
    %582 = vmatpush1.msra.mxu0 0.0
    %583 = vmatprep.subr.mxu0 0.0
    %584 = vmatpush1.msra.mxu0 0.0
    %585 = vmatprep.subr.mxu0 0.0
    %586 = vmatpush1.msra.mxu0 0.0
    %587 = vmatprep.subr.mxu0 0.0
    %588 = vmatpush1.msra.mxu0 0.0
    %589 = vmatprep.subr.mxu0 0.0
    %590 = vmatpush1.msra.mxu0 0.0
    %591 = vmatprep.mubr.f32.mxu0 0.0
    %592 = vmatmul.mubr.f32.gmra.mrb[0].mxu0 %v525
    %v593 = vpop.f32.mrb[0].mxu0
    %v594 = vadd.f32 0.0, %v593
    %v595 = vpop.f32.mrb[0].mxu0
    %596 = vdwg.mxu0
    %v597 = vadd.f32 %v520, %v594
    %599 = vrot.lane.b32.xlu0 %v519, 32
    %v600 = vpop.permute.xlu0 %599
    %v601 = vsel %vm55, %v600, 0
    %603 = vmatprep.subr.mxu0 0.0
    %604 = vmatpush1.msra.mxu0 %v397
    %605 = vmatprep.subr.mxu0 0.0
    %606 = vmatpush1.msra.mxu0 %v398
    %607 = vmatprep.subr.mxu0 0.0
    %608 = vmatpush1.msra.mxu0 %v399
    %609 = vmatprep.subr.mxu0 0.0
    %610 = vmatpush1.msra.mxu0 %v400
    %611 = vmatprep.subr.mxu0 0.0
    %612 = vmatpush1.msra.mxu0 0.0
    %613 = vmatprep.subr.mxu0 0.0
    %614 = vmatpush1.msra.mxu0 0.0
    %615 = vmatprep.subr.mxu0 0.0
    %616 = vmatpush1.msra.mxu0 0.0
    %617 = vmatprep.subr.mxu0 0.0
    %618 = vmatpush1.msra.mxu0 0.0
    %619 = vmatprep.subr.mxu0 0.0
    %620 = vmatpush1.msra.mxu0 0.0
    %621 = vmatprep.subr.mxu0 0.0
    %622 = vmatpush1.msra.mxu0 0.0
    %623 = vmatprep.subr.mxu0 0.0
    %624 = vmatpush1.msra.mxu0 0.0
    %625 = vmatprep.subr.mxu0 0.0
    %626 = vmatpush1.msra.mxu0 0.0
    %627 = vmatprep.subr.mxu0 0.0
    %628 = vmatpush1.msra.mxu0 0.0
    %629 = vmatprep.subr.mxu0 0.0
    %630 = vmatpush1.msra.mxu0 0.0
    %631 = vmatprep.subr.mxu0 0.0
    %632 = vmatpush1.msra.mxu0 0.0
    %633 = vmatprep.subr.mxu0 0.0
    %634 = vmatpush1.msra.mxu0 0.0
    %635 = vmatprep.subr.mxu0 0.0
    %636 = vmatpush1.msra.mxu0 0.0
    %637 = vmatprep.subr.mxu0 0.0
    %638 = vmatpush1.msra.mxu0 0.0
    %639 = vmatprep.subr.mxu0 0.0
    %640 = vmatpush1.msra.mxu0 0.0
    %641 = vmatprep.subr.mxu0 0.0
    %642 = vmatpush1.msra.mxu0 0.0
    %643 = vmatprep.subr.mxu0 0.0
    %644 = vmatpush1.msra.mxu0 0.0
    %645 = vmatprep.subr.mxu0 0.0
    %646 = vmatpush1.msra.mxu0 0.0
    %647 = vmatprep.subr.mxu0 0.0
    %648 = vmatpush1.msra.mxu0 0.0
    %649 = vmatprep.subr.mxu0 0.0
    %650 = vmatpush1.msra.mxu0 0.0
    %651 = vmatprep.subr.mxu0 0.0
    %652 = vmatpush1.msra.mxu0 0.0
    %653 = vmatprep.subr.mxu0 0.0
    %654 = vmatpush1.msra.mxu0 0.0
    %655 = vmatprep.subr.mxu0 0.0
    %656 = vmatpush1.msra.mxu0 0.0
    %657 = vmatprep.subr.mxu0 0.0
    %658 = vmatpush1.msra.mxu0 0.0
    %659 = vmatprep.subr.mxu0 0.0
    %660 = vmatpush1.msra.mxu0 0.0
    %661 = vmatprep.subr.mxu0 0.0
    %662 = vmatpush1.msra.mxu0 0.0
    %663 = vmatprep.subr.mxu0 0.0
    %664 = vmatpush1.msra.mxu0 0.0
    %665 = vmatprep.subr.mxu0 0.0
    %666 = vmatpush1.msra.mxu0 0.0
    %667 = vmatprep.mubr.f32.mxu0 0.0
    %668 = vmatmul.mubr.f32.gmra.mrb[0].mxu0 %v601
    %v669 = vpop.f32.mrb[0].mxu0
    %v670 = vadd.f32 0.0, %v669
    %v671 = vpop.f32.mrb[0].mxu0
    %672 = vdwg.mxu0
    %v673 = vadd.f32 %v521, %v670
    %v674 = vxor.u32 %v597, 2147483648
    %v675 = vmul.f32 %v674, 1.442695
    %v676 = vpow.pop %v675
    %v677 = vadd.f32 %v676, 1.0
    %v678 = vrcp.pop %v677
    %v679 = vmul.f32 1.0, %v678
    %v680 = vtanh.pop %v597
    %v681 = vmul.f32 %v679, %v489
    %683 = vrot.lane.b32.xlu0 %v680, 64
    %v684 = vpop.permute.xlu0 %683
    %v686 = vmul.f32 %v679, %v684
    %688 = vrot.lane.b32.xlu0 %v686, 32
    %v689 = vpop.permute.xlu0 %688
    %v691 = vadd.f32 %v681, %v689
    %v692 = vtanh.pop %v691
    %694 = vrot.lane.b32.xlu0 %v692, 64
    %v695 = vpop.permute.xlu0 %694
    %v697 = vmul.f32 %v679, %v695
    %v698 = vmax.f32 %v495, %v697
    %v699 = vxor.u32 %v673, 2147483648
    %v700 = vmul.f32 %v699, 1.442695
    %v701 = vpow.pop %v700
    %v702 = vadd.f32 %v701, 1.0
    %v703 = vrcp.pop %v702
    %v704 = vmul.f32 1.0, %v703
    %v705 = vtanh.pop %v673
    %v706 = vmul.f32 %v704, %v513
    %708 = vrot.lane.b32.xlu0 %v705, 64
    %v709 = vpop.permute.xlu0 %708
    %v711 = vmul.f32 %v704, %v709
    %713 = vrot.lane.b32.xlu0 %v711, 32
    %v714 = vpop.permute.xlu0 %713
    %v716 = vadd.f32 %v706, %v714
    %v717 = vtanh.pop %v716
    %719 = vrot.lane.b32.xlu0 %v717, 64
    %v720 = vpop.permute.xlu0 %719
    %v722 = vmul.f32 %v704, %v720
    %v723 = vmax.f32 %v519, %v722
    %v724 = vld [vmem:[#allocation2 + $0x10] sm:$0xff]
    %v725 = vld [vmem:[#allocation3 + $0x28] sm:$0xff]
    %727 = vrot.lane.b32.xlu0 %v697, 32
    %v728 = vpop.permute.xlu0 %727
    %v729 = vsel %vm55, %v728, 0
    %731 = vmatprep.subr.mxu0 0.0
    %732 = vmatpush1.msra.mxu0 %v319
    %733 = vmatprep.subr.mxu0 0.0
    %734 = vmatpush1.msra.mxu0 %v320
    %735 = vmatprep.subr.mxu0 0.0
    %736 = vmatpush1.msra.mxu0 %v321
    %737 = vmatprep.subr.mxu0 0.0
    %738 = vmatpush1.msra.mxu0 %v322
    %739 = vmatprep.subr.mxu0 0.0
    %740 = vmatpush1.msra.mxu0 0.0
    %741 = vmatprep.subr.mxu0 0.0
    %742 = vmatpush1.msra.mxu0 0.0
    %743 = vmatprep.subr.mxu0 0.0
    %744 = vmatpush1.msra.mxu0 0.0
    %745 = vmatprep.subr.mxu0 0.0
    %746 = vmatpush1.msra.mxu0 0.0
    %747 = vmatprep.subr.mxu0 0.0
    %748 = vmatpush1.msra.mxu0 0.0
    %749 = vmatprep.subr.mxu0 0.0
    %750 = vmatpush1.msra.mxu0 0.0
    %751 = vmatprep.subr.mxu0 0.0
    %752 = vmatpush1.msra.mxu0 0.0
    %753 = vmatprep.subr.mxu0 0.0
    %754 = vmatpush1.msra.mxu0 0.0
    %755 = vmatprep.subr.mxu0 0.0
    %756 = vmatpush1.msra.mxu0 0.0
    %757 = vmatprep.subr.mxu0 0.0
    %758 = vmatpush1.msra.mxu0 0.0
    %759 = vmatprep.subr.mxu0 0.0
    %760 = vmatpush1.msra.mxu0 0.0
    %761 = vmatprep.subr.mxu0 0.0
    %762 = vmatpush1.msra.mxu0 0.0
    %763 = vmatprep.subr.mxu0 0.0
    %764 = vmatpush1.msra.mxu0 0.0
    %765 = vmatprep.subr.mxu0 0.0
    %766 = vmatpush1.msra.mxu0 0.0
    %767 = vmatprep.subr.mxu0 0.0
    %768 = vmatpush1.msra.mxu0 0.0
    %769 = vmatprep.subr.mxu0 0.0
    %770 = vmatpush1.msra.mxu0 0.0
    %771 = vmatprep.subr.mxu0 0.0
    %772 = vmatpush1.msra.mxu0 0.0
    %773 = vmatprep.subr.mxu0 0.0
    %774 = vmatpush1.msra.mxu0 0.0
    %775 = vmatprep.subr.mxu0 0.0
    %776 = vmatpush1.msra.mxu0 0.0
    %777 = vmatprep.subr.mxu0 0.0
    %778 = vmatpush1.msra.mxu0 0.0
    %779 = vmatprep.subr.mxu0 0.0
    %780 = vmatpush1.msra.mxu0 0.0
    %781 = vmatprep.subr.mxu0 0.0
    %782 = vmatpush1.msra.mxu0 0.0
    %783 = vmatprep.subr.mxu0 0.0
    %784 = vmatpush1.msra.mxu0 0.0
    %785 = vmatprep.subr.mxu0 0.0
    %786 = vmatpush1.msra.mxu0 0.0
    %787 = vmatprep.subr.mxu0 0.0
    %788 = vmatpush1.msra.mxu0 0.0
    %789 = vmatprep.subr.mxu0 0.0
    %790 = vmatpush1.msra.mxu0 0.0
    %791 = vmatprep.subr.mxu0 0.0
    %792 = vmatpush1.msra.mxu0 0.0
    %793 = vmatprep.subr.mxu0 0.0
    %794 = vmatpush1.msra.mxu0 0.0
    %795 = vmatprep.mubr.f32.mxu0 0.0
    %796 = vmatmul.mubr.f32.gmra.mrb[0].mxu0 %v729
    %v797 = vpop.f32.mrb[0].mxu0
    %v798 = vadd.f32 0.0, %v797
    %v799 = vpop.f32.mrb[0].mxu0
    %800 = vdwg.mxu0
    %v801 = vadd.f32 %v724, %v798
    %803 = vrot.lane.b32.xlu0 %v722, 32
    %v804 = vpop.permute.xlu0 %803
    %v805 = vsel %vm55, %v804, 0
    %807 = vmatprep.subr.mxu0 0.0
    %808 = vmatpush1.msra.mxu0 %v397
    %809 = vmatprep.subr.mxu0 0.0
    %810 = vmatpush1.msra.mxu0 %v398
    %811 = vmatprep.subr.mxu0 0.0
    %812 = vmatpush1.msra.mxu0 %v399
    %813 = vmatprep.subr.mxu0 0.0
    %814 = vmatpush1.msra.mxu0 %v400
    %815 = vmatprep.subr.mxu0 0.0
    %816 = vmatpush1.msra.mxu0 0.0
    %817 = vmatprep.subr.mxu0 0.0
    %818 = vmatpush1.msra.mxu0 0.0
    %819 = vmatprep.subr.mxu0 0.0
    %820 = vmatpush1.msra.mxu0 0.0
    %821 = vmatprep.subr.mxu0 0.0
    %822 = vmatpush1.msra.mxu0 0.0
    %823 = vmatprep.subr.mxu0 0.0
    %824 = vmatpush1.msra.mxu0 0.0
    %825 = vmatprep.subr.mxu0 0.0
    %826 = vmatpush1.msra.mxu0 0.0
    %827 = vmatprep.subr.mxu0 0.0
    %828 = vmatpush1.msra.mxu0 0.0
    %829 = vmatprep.subr.mxu0 0.0
    %830 = vmatpush1.msra.mxu0 0.0
    %831 = vmatprep.subr.mxu0 0.0
    %832 = vmatpush1.msra.mxu0 0.0
    %833 = vmatprep.subr.mxu0 0.0
    %834 = vmatpush1.msra.mxu0 0.0
    %835 = vmatprep.subr.mxu0 0.0
    %836 = vmatpush1.msra.mxu0 0.0
    %837 = vmatprep.subr.mxu0 0.0
    %838 = vmatpush1.msra.mxu0 0.0
    %839 = vmatprep.subr.mxu0 0.0
    %840 = vmatpush1.msra.mxu0 0.0
    %841 = vmatprep.subr.mxu0 0.0
    %842 = vmatpush1.msra.mxu0 0.0
    %843 = vmatprep.subr.mxu0 0.0
    %844 = vmatpush1.msra.mxu0 0.0
    %845 = vmatprep.subr.mxu0 0.0
    %846 = vmatpush1.msra.mxu0 0.0
    %847 = vmatprep.subr.mxu0 0.0
    %848 = vmatpush1.msra.mxu0 0.0
    %849 = vmatprep.subr.mxu0 0.0
    %850 = vmatpush1.msra.mxu0 0.0
    %851 = vmatprep.subr.mxu0 0.0
    %852 = vmatpush1.msra.mxu0 0.0
    %853 = vmatprep.subr.mxu0 0.0
    %854 = vmatpush1.msra.mxu0 0.0
    %855 = vmatprep.subr.mxu0 0.0
    %856 = vmatpush1.msra.mxu0 0.0
    %857 = vmatprep.subr.mxu0 0.0
    %858 = vmatpush1.msra.mxu0 0.0
    %859 = vmatprep.subr.mxu0 0.0
    %860 = vmatpush1.msra.mxu0 0.0
    %861 = vmatprep.subr.mxu0 0.0
    %862 = vmatpush1.msra.mxu0 0.0
    %863 = vmatprep.subr.mxu0 0.0
    %864 = vmatpush1.msra.mxu0 0.0
    %865 = vmatprep.subr.mxu0 0.0
    %866 = vmatpush1.msra.mxu0 0.0
    %867 = vmatprep.subr.mxu0 0.0
    %868 = vmatpush1.msra.mxu0 0.0
    %869 = vmatprep.subr.mxu0 0.0
    %870 = vmatpush1.msra.mxu0 0.0
    %871 = vmatprep.mubr.f32.mxu0 0.0
    %872 = vmatmul.mubr.f32.gmra.mrb[0].mxu0 %v805
    %v873 = vpop.f32.mrb[0].mxu0
    %v874 = vadd.f32 0.0, %v873
    %v875 = vpop.f32.mrb[0].mxu0
    %876 = vdwg.mxu0
    %v877 = vadd.f32 %v725, %v874
    %v878 = vxor.u32 %v801, 2147483648
    %v879 = vmul.f32 %v878, 1.442695
    %v880 = vpow.pop %v879
    %v881 = vadd.f32 %v880, 1.0
    %v882 = vrcp.pop %v881
    %v883 = vmul.f32 1.0, %v882
    %v884 = vtanh.pop %v801
    %v885 = vmul.f32 %v883, %v691
    %887 = vrot.lane.b32.xlu0 %v884, 64
    %v888 = vpop.permute.xlu0 %887
    %v890 = vmul.f32 %v883, %v888
    %892 = vrot.lane.b32.xlu0 %v890, 32
    %v893 = vpop.permute.xlu0 %892
    %v895 = vadd.f32 %v885, %v893
    %v896 = vtanh.pop %v895
    %898 = vrot.lane.b32.xlu0 %v896, 64
    %v899 = vpop.permute.xlu0 %898
    %v901 = vmul.f32 %v883, %v899
    %v902 = vmax.f32 %v698, %v901
    %v903 = vxor.u32 %v877, 2147483648
    %v904 = vmul.f32 %v903, 1.442695
    %v905 = vpow.pop %v904
    %v906 = vadd.f32 %v905, 1.0
    %v907 = vrcp.pop %v906
    %v908 = vmul.f32 1.0, %v907
    %v909 = vtanh.pop %v877
    %v910 = vmul.f32 %v908, %v716
    %912 = vrot.lane.b32.xlu0 %v909, 64
    %v913 = vpop.permute.xlu0 %912
    %v915 = vmul.f32 %v908, %v913
    %917 = vrot.lane.b32.xlu0 %v915, 32
    %v918 = vpop.permute.xlu0 %917
    %v920 = vadd.f32 %v910, %v918
    %v921 = vtanh.pop %v920
    %923 = vrot.lane.b32.xlu0 %v921, 64
    %v924 = vpop.permute.xlu0 %923
    %v926 = vmul.f32 %v908, %v924
    %v927 = vmax.f32 %v723, %v926
    %v928 = vld [vmem:[#allocation2 + $0x18] sm:$0xff]
    %v929 = vld [vmem:[#allocation3 + $0x20] sm:$0xff]
    %931 = vrot.lane.b32.xlu0 %v901, 32
    %v932 = vpop.permute.xlu0 %931
    %v933 = vsel %vm55, %v932, 0
    %935 = vmatprep.subr.mxu0 0.0
    %936 = vmatpush1.msra.mxu0 %v319
    %937 = vmatprep.subr.mxu0 0.0
    %938 = vmatpush1.msra.mxu0 %v320
    %939 = vmatprep.subr.mxu0 0.0
    %940 = vmatpush1.msra.mxu0 %v321
    %941 = vmatprep.subr.mxu0 0.0
    %942 = vmatpush1.msra.mxu0 %v322
    %943 = vmatprep.subr.mxu0 0.0
    %944 = vmatpush1.msra.mxu0 0.0
    %945 = vmatprep.subr.mxu0 0.0
    %946 = vmatpush1.msra.mxu0 0.0
    %947 = vmatprep.subr.mxu0 0.0
    %948 = vmatpush1.msra.mxu0 0.0
    %949 = vmatprep.subr.mxu0 0.0
    %950 = vmatpush1.msra.mxu0 0.0
    %951 = vmatprep.subr.mxu0 0.0
    %952 = vmatpush1.msra.mxu0 0.0
    %953 = vmatprep.subr.mxu0 0.0
    %954 = vmatpush1.msra.mxu0 0.0
    %955 = vmatprep.subr.mxu0 0.0
    %956 = vmatpush1.msra.mxu0 0.0
    %957 = vmatprep.subr.mxu0 0.0
    %958 = vmatpush1.msra.mxu0 0.0
    %959 = vmatprep.subr.mxu0 0.0
    %960 = vmatpush1.msra.mxu0 0.0
    %961 = vmatprep.subr.mxu0 0.0
    %962 = vmatpush1.msra.mxu0 0.0
    %963 = vmatprep.subr.mxu0 0.0
    %964 = vmatpush1.msra.mxu0 0.0
    %965 = vmatprep.subr.mxu0 0.0
    %966 = vmatpush1.msra.mxu0 0.0
    %967 = vmatprep.subr.mxu0 0.0
    %968 = vmatpush1.msra.mxu0 0.0
    %969 = vmatprep.subr.mxu0 0.0
    %970 = vmatpush1.msra.mxu0 0.0
    %971 = vmatprep.subr.mxu0 0.0
    %972 = vmatpush1.msra.mxu0 0.0
    %973 = vmatprep.subr.mxu0 0.0
    %974 = vmatpush1.msra.mxu0 0.0
    %975 = vmatprep.subr.mxu0 0.0
    %976 = vmatpush1.msra.mxu0 0.0
    %977 = vmatprep.subr.mxu0 0.0
    %978 = vmatpush1.msra.mxu0 0.0
    %979 = vmatprep.subr.mxu0 0.0
    %980 = vmatpush1.msra.mxu0 0.0
    %981 = vmatprep.subr.mxu0 0.0
    %982 = vmatpush1.msra.mxu0 0.0
    %983 = vmatprep.subr.mxu0 0.0
    %984 = vmatpush1.msra.mxu0 0.0
    %985 = vmatprep.subr.mxu0 0.0
    %986 = vmatpush1.msra.mxu0 0.0
    %987 = vmatprep.subr.mxu0 0.0
    %988 = vmatpush1.msra.mxu0 0.0
    %989 = vmatprep.subr.mxu0 0.0
    %990 = vmatpush1.msra.mxu0 0.0
    %991 = vmatprep.subr.mxu0 0.0
    %992 = vmatpush1.msra.mxu0 0.0
    %993 = vmatprep.subr.mxu0 0.0
    %994 = vmatpush1.msra.mxu0 0.0
    %995 = vmatprep.subr.mxu0 0.0
    %996 = vmatpush1.msra.mxu0 0.0
    %997 = vmatprep.subr.mxu0 0.0
    %998 = vmatpush1.msra.mxu0 0.0
    %999 = vmatprep.mubr.f32.mxu0 0.0
    %1000 = vmatmul.mubr.f32.gmra.mrb[0].mxu0 %v933
    %v1001 = vpop.f32.mrb[0].mxu0
    %v1002 = vadd.f32 0.0, %v1001
    %v1003 = vpop.f32.mrb[0].mxu0
    %1004 = vdwg.mxu0
    %v1005 = vadd.f32 %v928, %v1002
    %1007 = vrot.lane.b32.xlu0 %v926, 32
    %v1008 = vpop.permute.xlu0 %1007
    %v1009 = vsel %vm55, %v1008, 0
    %1011 = vmatprep.subr.mxu0 0.0
    %1012 = vmatpush1.msra.mxu0 %v397
    %1013 = vmatprep.subr.mxu0 0.0
    %1014 = vmatpush1.msra.mxu0 %v398
    %1015 = vmatprep.subr.mxu0 0.0
    %1016 = vmatpush1.msra.mxu0 %v399
    %1017 = vmatprep.subr.mxu0 0.0
    %1018 = vmatpush1.msra.mxu0 %v400
    %1019 = vmatprep.subr.mxu0 0.0
    %1020 = vmatpush1.msra.mxu0 0.0
    %1021 = vmatprep.subr.mxu0 0.0
    %1022 = vmatpush1.msra.mxu0 0.0
    %1023 = vmatprep.subr.mxu0 0.0
    %1024 = vmatpush1.msra.mxu0 0.0
    %1025 = vmatprep.subr.mxu0 0.0
    %1026 = vmatpush1.msra.mxu0 0.0
    %1027 = vmatprep.subr.mxu0 0.0
    %1028 = vmatpush1.msra.mxu0 0.0
    %1029 = vmatprep.subr.mxu0 0.0
    %1030 = vmatpush1.msra.mxu0 0.0
    %1031 = vmatprep.subr.mxu0 0.0
    %1032 = vmatpush1.msra.mxu0 0.0
    %1033 = vmatprep.subr.mxu0 0.0
    %1034 = vmatpush1.msra.mxu0 0.0
    %1035 = vmatprep.subr.mxu0 0.0
    %1036 = vmatpush1.msra.mxu0 0.0
    %1037 = vmatprep.subr.mxu0 0.0
    %1038 = vmatpush1.msra.mxu0 0.0
    %1039 = vmatprep.subr.mxu0 0.0
    %1040 = vmatpush1.msra.mxu0 0.0
    %1041 = vmatprep.subr.mxu0 0.0
    %1042 = vmatpush1.msra.mxu0 0.0
    %1043 = vmatprep.subr.mxu0 0.0
    %1044 = vmatpush1.msra.mxu0 0.0
    %1045 = vmatprep.subr.mxu0 0.0
    %1046 = vmatpush1.msra.mxu0 0.0
    %1047 = vmatprep.subr.mxu0 0.0
    %1048 = vmatpush1.msra.mxu0 0.0
    %1049 = vmatprep.subr.mxu0 0.0
    %1050 = vmatpush1.msra.mxu0 0.0
    %1051 = vmatprep.subr.mxu0 0.0
    %1052 = vmatpush1.msra.mxu0 0.0
    %1053 = vmatprep.subr.mxu0 0.0
    %1054 = vmatpush1.msra.mxu0 0.0
    %1055 = vmatprep.subr.mxu0 0.0
    %1056 = vmatpush1.msra.mxu0 0.0
    %1057 = vmatprep.subr.mxu0 0.0
    %1058 = vmatpush1.msra.mxu0 0.0
    %1059 = vmatprep.subr.mxu0 0.0
    %1060 = vmatpush1.msra.mxu0 0.0
    %1061 = vmatprep.subr.mxu0 0.0
    %1062 = vmatpush1.msra.mxu0 0.0
    %1063 = vmatprep.subr.mxu0 0.0
    %1064 = vmatpush1.msra.mxu0 0.0
    %1065 = vmatprep.subr.mxu0 0.0
    %1066 = vmatpush1.msra.mxu0 0.0
    %1067 = vmatprep.subr.mxu0 0.0
    %1068 = vmatpush1.msra.mxu0 0.0
    %1069 = vmatprep.subr.mxu0 0.0
    %1070 = vmatpush1.msra.mxu0 0.0
    %1071 = vmatprep.subr.mxu0 0.0
    %1072 = vmatpush1.msra.mxu0 0.0
    %1073 = vmatprep.subr.mxu0 0.0
    %1074 = vmatpush1.msra.mxu0 0.0
    %1075 = vmatprep.mubr.f32.mxu0 0.0
    %1076 = vmatmul.mubr.f32.gmra.mrb[0].mxu0 %v1009
    %v1077 = vpop.f32.mrb[0].mxu0
    %v1078 = vadd.f32 0.0, %v1077
    %v1079 = vpop.f32.mrb[0].mxu0
    %1080 = vdwg.mxu0
    %v1081 = vadd.f32 %v929, %v1078
    %v1082 = vxor.u32 %v1005, 2147483648
    %v1083 = vmul.f32 %v1082, 1.442695
    %v1084 = vpow.pop %v1083
    %v1085 = vadd.f32 %v1084, 1.0
    %v1086 = vrcp.pop %v1085
    %v1087 = vmul.f32 1.0, %v1086
    %v1088 = vtanh.pop %v1005
    %v1089 = vmul.f32 %v1087, %v895
    %1091 = vrot.lane.b32.xlu0 %v1088, 64
    %v1092 = vpop.permute.xlu0 %1091
    %v1094 = vmul.f32 %v1087, %v1092
    %1096 = vrot.lane.b32.xlu0 %v1094, 32
    %v1097 = vpop.permute.xlu0 %1096
    %v1099 = vadd.f32 %v1089, %v1097
    %v1100 = vtanh.pop %v1099
    %1102 = vrot.lane.b32.xlu0 %v1100, 64
    %v1103 = vpop.permute.xlu0 %1102
    %v1105 = vmul.f32 %v1087, %v1103
    %v1106 = vmax.f32 %v902, %v1105
    %v1107 = vxor.u32 %v1081, 2147483648
    %v1108 = vmul.f32 %v1107, 1.442695
    %v1109 = vpow.pop %v1108
    %v1110 = vadd.f32 %v1109, 1.0
    %v1111 = vrcp.pop %v1110
    %v1112 = vmul.f32 1.0, %v1111
    %v1113 = vtanh.pop %v1081
    %v1114 = vmul.f32 %v1112, %v920
    %1116 = vrot.lane.b32.xlu0 %v1113, 64
    %v1117 = vpop.permute.xlu0 %1116
    %v1119 = vmul.f32 %v1112, %v1117
    %1121 = vrot.lane.b32.xlu0 %v1119, 32
    %v1122 = vpop.permute.xlu0 %1121
    %v1124 = vadd.f32 %v1114, %v1122
    %v1125 = vtanh.pop %v1124
    %1127 = vrot.lane.b32.xlu0 %v1125, 64
    %v1128 = vpop.permute.xlu0 %1127
    %v1130 = vmul.f32 %v1112, %v1128
    %v1131 = vmax.f32 %v927, %v1130
    %v1132 = vld [vmem:[#allocation2 + $0x20] sm:$0xff]
    %v1133 = vld [vmem:[#allocation3 + $0x18] sm:$0xff]
    %1135 = vrot.lane.b32.xlu0 %v1105, 32
    %v1136 = vpop.permute.xlu0 %1135
    %v1137 = vsel %vm55, %v1136, 0
    %1139 = vmatprep.subr.mxu0 0.0
    %1140 = vmatpush1.msra.mxu0 %v319
    %1141 = vmatprep.subr.mxu0 0.0
    %1142 = vmatpush1.msra.mxu0 %v320
    %1143 = vmatprep.subr.mxu0 0.0
    %1144 = vmatpush1.msra.mxu0 %v321
    %1145 = vmatprep.subr.mxu0 0.0
    %1146 = vmatpush1.msra.mxu0 %v322
    %1147 = vmatprep.subr.mxu0 0.0
    %1148 = vmatpush1.msra.mxu0 0.0
    %1149 = vmatprep.subr.mxu0 0.0
    %1150 = vmatpush1.msra.mxu0 0.0
    %1151 = vmatprep.subr.mxu0 0.0
    %1152 = vmatpush1.msra.mxu0 0.0
    %1153 = vmatprep.subr.mxu0 0.0
    %1154 = vmatpush1.msra.mxu0 0.0
    %1155 = vmatprep.subr.mxu0 0.0
    %1156 = vmatpush1.msra.mxu0 0.0
    %1157 = vmatprep.subr.mxu0 0.0
    %1158 = vmatpush1.msra.mxu0 0.0
    %1159 = vmatprep.subr.mxu0 0.0
    %1160 = vmatpush1.msra.mxu0 0.0
    %1161 = vmatprep.subr.mxu0 0.0
    %1162 = vmatpush1.msra.mxu0 0.0
    %1163 = vmatprep.subr.mxu0 0.0
    %1164 = vmatpush1.msra.mxu0 0.0
    %1165 = vmatprep.subr.mxu0 0.0
    %1166 = vmatpush1.msra.mxu0 0.0
    %1167 = vmatprep.subr.mxu0 0.0
    %1168 = vmatpush1.msra.mxu0 0.0
    %1169 = vmatprep.subr.mxu0 0.0
    %1170 = vmatpush1.msra.mxu0 0.0
    %1171 = vmatprep.subr.mxu0 0.0
    %1172 = vmatpush1.msra.mxu0 0.0
    %1173 = vmatprep.subr.mxu0 0.0
    %1174 = vmatpush1.msra.mxu0 0.0
    %1175 = vmatprep.subr.mxu0 0.0
    %1176 = vmatpush1.msra.mxu0 0.0
    %1177 = vmatprep.subr.mxu0 0.0
    %1178 = vmatpush1.msra.mxu0 0.0
    %1179 = vmatprep.subr.mxu0 0.0
    %1180 = vmatpush1.msra.mxu0 0.0
    %1181 = vmatprep.subr.mxu0 0.0
    %1182 = vmatpush1.msra.mxu0 0.0
    %1183 = vmatprep.subr.mxu0 0.0
    %1184 = vmatpush1.msra.mxu0 0.0
    %1185 = vmatprep.subr.mxu0 0.0
    %1186 = vmatpush1.msra.mxu0 0.0
    %1187 = vmatprep.subr.mxu0 0.0
    %1188 = vmatpush1.msra.mxu0 0.0
    %1189 = vmatprep.subr.mxu0 0.0
    %1190 = vmatpush1.msra.mxu0 0.0
    %1191 = vmatprep.subr.mxu0 0.0
    %1192 = vmatpush1.msra.mxu0 0.0
    %1193 = vmatprep.subr.mxu0 0.0
    %1194 = vmatpush1.msra.mxu0 0.0
    %1195 = vmatprep.subr.mxu0 0.0
    %1196 = vmatpush1.msra.mxu0 0.0
    %1197 = vmatprep.subr.mxu0 0.0
    %1198 = vmatpush1.msra.mxu0 0.0
    %1199 = vmatprep.subr.mxu0 0.0
    %1200 = vmatpush1.msra.mxu0 0.0
    %1201 = vmatprep.subr.mxu0 0.0
    %1202 = vmatpush1.msra.mxu0 0.0
    %1203 = vmatprep.mubr.f32.mxu0 0.0
    %1204 = vmatmul.mubr.f32.gmra.mrb[0].mxu0 %v1137
    %v1205 = vpop.f32.mrb[0].mxu0
    %v1206 = vadd.f32 0.0, %v1205
    %v1207 = vpop.f32.mrb[0].mxu0
    %1208 = vdwg.mxu0
    %v1209 = vadd.f32 %v1132, %v1206
    %1211 = vrot.lane.b32.xlu0 %v1130, 32
    %v1212 = vpop.permute.xlu0 %1211
    %v1213 = vsel %vm55, %v1212, 0
    %1215 = vmatprep.subr.mxu0 0.0
    %1216 = vmatpush1.msra.mxu0 %v397
    %1217 = vmatprep.subr.mxu0 0.0
    %1218 = vmatpush1.msra.mxu0 %v398
    %1219 = vmatprep.subr.mxu0 0.0
    %1220 = vmatpush1.msra.mxu0 %v399
    %1221 = vmatprep.subr.mxu0 0.0
    %1222 = vmatpush1.msra.mxu0 %v400
    %1223 = vmatprep.subr.mxu0 0.0
    %1224 = vmatpush1.msra.mxu0 0.0
    %1225 = vmatprep.subr.mxu0 0.0
    %1226 = vmatpush1.msra.mxu0 0.0
    %1227 = vmatprep.subr.mxu0 0.0
    %1228 = vmatpush1.msra.mxu0 0.0
    %1229 = vmatprep.subr.mxu0 0.0
    %1230 = vmatpush1.msra.mxu0 0.0
    %1231 = vmatprep.subr.mxu0 0.0
    %1232 = vmatpush1.msra.mxu0 0.0
    %1233 = vmatprep.subr.mxu0 0.0
    %1234 = vmatpush1.msra.mxu0 0.0
    %1235 = vmatprep.subr.mxu0 0.0
    %1236 = vmatpush1.msra.mxu0 0.0
    %1237 = vmatprep.subr.mxu0 0.0
    %1238 = vmatpush1.msra.mxu0 0.0
    %1239 = vmatprep.subr.mxu0 0.0
    %1240 = vmatpush1.msra.mxu0 0.0
    %1241 = vmatprep.subr.mxu0 0.0
    %1242 = vmatpush1.msra.mxu0 0.0
    %1243 = vmatprep.subr.mxu0 0.0
    %1244 = vmatpush1.msra.mxu0 0.0
    %1245 = vmatprep.subr.mxu0 0.0
    %1246 = vmatpush1.msra.mxu0 0.0
    %1247 = vmatprep.subr.mxu0 0.0
    %1248 = vmatpush1.msra.mxu0 0.0
    %1249 = vmatprep.subr.mxu0 0.0
    %1250 = vmatpush1.msra.mxu0 0.0
    %1251 = vmatprep.subr.mxu0 0.0
    %1252 = vmatpush1.msra.mxu0 0.0
    %1253 = vmatprep.subr.mxu0 0.0
    %1254 = vmatpush1.msra.mxu0 0.0
    %1255 = vmatprep.subr.mxu0 0.0
    %1256 = vmatpush1.msra.mxu0 0.0
    %1257 = vmatprep.subr.mxu0 0.0
    %1258 = vmatpush1.msra.mxu0 0.0
    %1259 = vmatprep.subr.mxu0 0.0
    %1260 = vmatpush1.msra.mxu0 0.0
    %1261 = vmatprep.subr.mxu0 0.0
    %1262 = vmatpush1.msra.mxu0 0.0
    %1263 = vmatprep.subr.mxu0 0.0
    %1264 = vmatpush1.msra.mxu0 0.0
    %1265 = vmatprep.subr.mxu0 0.0
    %1266 = vmatpush1.msra.mxu0 0.0
    %1267 = vmatprep.subr.mxu0 0.0
    %1268 = vmatpush1.msra.mxu0 0.0
    %1269 = vmatprep.subr.mxu0 0.0
    %1270 = vmatpush1.msra.mxu0 0.0
    %1271 = vmatprep.subr.mxu0 0.0
    %1272 = vmatpush1.msra.mxu0 0.0
    %1273 = vmatprep.subr.mxu0 0.0
    %1274 = vmatpush1.msra.mxu0 0.0
    %1275 = vmatprep.subr.mxu0 0.0
    %1276 = vmatpush1.msra.mxu0 0.0
    %1277 = vmatprep.subr.mxu0 0.0
    %1278 = vmatpush1.msra.mxu0 0.0
    %1279 = vmatprep.mubr.f32.mxu0 0.0
    %1280 = vmatmul.mubr.f32.gmra.mrb[0].mxu0 %v1213
    %v1281 = vpop.f32.mrb[0].mxu0
    %v1282 = vadd.f32 0.0, %v1281
    %v1283 = vpop.f32.mrb[0].mxu0
    %1284 = vdwg.mxu0
    %v1285 = vadd.f32 %v1133, %v1282
    %v1286 = vxor.u32 %v1209, 2147483648
    %v1287 = vmul.f32 %v1286, 1.442695
    %v1288 = vpow.pop %v1287
    %v1289 = vadd.f32 %v1288, 1.0
    %v1290 = vrcp.pop %v1289
    %v1291 = vmul.f32 1.0, %v1290
    %v1292 = vtanh.pop %v1209
    %v1293 = vmul.f32 %v1291, %v1099
    %1295 = vrot.lane.b32.xlu0 %v1292, 64
    %v1296 = vpop.permute.xlu0 %1295
    %v1298 = vmul.f32 %v1291, %v1296
    %1300 = vrot.lane.b32.xlu0 %v1298, 32
    %v1301 = vpop.permute.xlu0 %1300
    %v1303 = vadd.f32 %v1293, %v1301
    %v1304 = vtanh.pop %v1303
    %1306 = vrot.lane.b32.xlu0 %v1304, 64
    %v1307 = vpop.permute.xlu0 %1306
    %v1309 = vmul.f32 %v1291, %v1307
    %v1310 = vmax.f32 %v1106, %v1309
    %v1311 = vxor.u32 %v1285, 2147483648
    %v1312 = vmul.f32 %v1311, 1.442695
    %v1313 = vpow.pop %v1312
    %v1314 = vadd.f32 %v1313, 1.0
    %v1315 = vrcp.pop %v1314
    %v1316 = vmul.f32 1.0, %v1315
    %v1317 = vtanh.pop %v1285
    %v1318 = vmul.f32 %v1316, %v1124
    %1320 = vrot.lane.b32.xlu0 %v1317, 64
    %v1321 = vpop.permute.xlu0 %1320
    %v1323 = vmul.f32 %v1316, %v1321
    %1325 = vrot.lane.b32.xlu0 %v1323, 32
    %v1326 = vpop.permute.xlu0 %1325
    %v1328 = vadd.f32 %v1318, %v1326
    %v1329 = vtanh.pop %v1328
    %1331 = vrot.lane.b32.xlu0 %v1329, 64
    %v1332 = vpop.permute.xlu0 %1331
    %v1334 = vmul.f32 %v1316, %v1332
    %v1335 = vmax.f32 %v1131, %v1334
    %v1336 = vld [vmem:[#allocation2 + $0x28] sm:$0xff]
    %v1337 = vld [vmem:[#allocation3 + $0x10] sm:$0xff]
    %1339 = vrot.lane.b32.xlu0 %v1309, 32
    %v1340 = vpop.permute.xlu0 %1339
    %v1341 = vsel %vm55, %v1340, 0
    %1343 = vmatprep.subr.mxu0 0.0
    %1344 = vmatpush1.msra.mxu0 %v319
    %1345 = vmatprep.subr.mxu0 0.0
    %1346 = vmatpush1.msra.mxu0 %v320
    %1347 = vmatprep.subr.mxu0 0.0
    %1348 = vmatpush1.msra.mxu0 %v321
    %1349 = vmatprep.subr.mxu0 0.0
    %1350 = vmatpush1.msra.mxu0 %v322
    %1351 = vmatprep.subr.mxu0 0.0
    %1352 = vmatpush1.msra.mxu0 0.0
    %1353 = vmatprep.subr.mxu0 0.0
    %1354 = vmatpush1.msra.mxu0 0.0
    %1355 = vmatprep.subr.mxu0 0.0
    %1356 = vmatpush1.msra.mxu0 0.0
    %1357 = vmatprep.subr.mxu0 0.0
    %1358 = vmatpush1.msra.mxu0 0.0
    %1359 = vmatprep.subr.mxu0 0.0
    %1360 = vmatpush1.msra.mxu0 0.0
    %1361 = vmatprep.subr.mxu0 0.0
    %1362 = vmatpush1.msra.mxu0 0.0
    %1363 = vmatprep.subr.mxu0 0.0
    %1364 = vmatpush1.msra.mxu0 0.0
    %1365 = vmatprep.subr.mxu0 0.0
    %1366 = vmatpush1.msra.mxu0 0.0
    %1367 = vmatprep.subr.mxu0 0.0
    %1368 = vmatpush1.msra.mxu0 0.0
    %1369 = vmatprep.subr.mxu0 0.0
    %1370 = vmatpush1.msra.mxu0 0.0
    %1371 = vmatprep.subr.mxu0 0.0
    %1372 = vmatpush1.msra.mxu0 0.0
    %1373 = vmatprep.subr.mxu0 0.0
    %1374 = vmatpush1.msra.mxu0 0.0
    %1375 = vmatprep.subr.mxu0 0.0
    %1376 = vmatpush1.msra.mxu0 0.0
    %1377 = vmatprep.subr.mxu0 0.0
    %1378 = vmatpush1.msra.mxu0 0.0
    %1379 = vmatprep.subr.mxu0 0.0
    %1380 = vmatpush1.msra.mxu0 0.0
    %1381 = vmatprep.subr.mxu0 0.0
    %1382 = vmatpush1.msra.mxu0 0.0
    %1383 = vmatprep.subr.mxu0 0.0
    %1384 = vmatpush1.msra.mxu0 0.0
    %1385 = vmatprep.subr.mxu0 0.0
    %1386 = vmatpush1.msra.mxu0 0.0
    %1387 = vmatprep.subr.mxu0 0.0
    %1388 = vmatpush1.msra.mxu0 0.0
    %1389 = vmatprep.subr.mxu0 0.0
    %1390 = vmatpush1.msra.mxu0 0.0
    %1391 = vmatprep.subr.mxu0 0.0
    %1392 = vmatpush1.msra.mxu0 0.0
    %1393 = vmatprep.subr.mxu0 0.0
    %1394 = vmatpush1.msra.mxu0 0.0
    %1395 = vmatprep.subr.mxu0 0.0
    %1396 = vmatpush1.msra.mxu0 0.0
    %1397 = vmatprep.subr.mxu0 0.0
    %1398 = vmatpush1.msra.mxu0 0.0
    %1399 = vmatprep.subr.mxu0 0.0
    %1400 = vmatpush1.msra.mxu0 0.0
    %1401 = vmatprep.subr.mxu0 0.0
    %1402 = vmatpush1.msra.mxu0 0.0
    %1403 = vmatprep.subr.mxu0 0.0
    %1404 = vmatpush1.msra.mxu0 0.0
    %1405 = vmatprep.subr.mxu0 0.0
    %1406 = vmatpush1.msra.mxu0 0.0
    %1407 = vmatprep.mubr.f32.mxu0 0.0
    %1408 = vmatmul.mubr.f32.gmra.mrb[0].mxu0 %v1341
    %v1409 = vpop.f32.mrb[0].mxu0
    %v1410 = vadd.f32 0.0, %v1409
    %v1411 = vpop.f32.mrb[0].mxu0
    %1412 = vdwg.mxu0
    %v1413 = vadd.f32 %v1336, %v1410
    %1415 = vrot.lane.b32.xlu0 %v1334, 32
    %v1416 = vpop.permute.xlu0 %1415
    %v1417 = vsel %vm55, %v1416, 0
    %1419 = vmatprep.subr.mxu0 0.0
    %1420 = vmatpush1.msra.mxu0 %v397
    %1421 = vmatprep.subr.mxu0 0.0
    %1422 = vmatpush1.msra.mxu0 %v398
    %1423 = vmatprep.subr.mxu0 0.0
    %1424 = vmatpush1.msra.mxu0 %v399
    %1425 = vmatprep.subr.mxu0 0.0
    %1426 = vmatpush1.msra.mxu0 %v400
    %1427 = vmatprep.subr.mxu0 0.0
    %1428 = vmatpush1.msra.mxu0 0.0
    %1429 = vmatprep.subr.mxu0 0.0
    %1430 = vmatpush1.msra.mxu0 0.0
    %1431 = vmatprep.subr.mxu0 0.0
    %1432 = vmatpush1.msra.mxu0 0.0
    %1433 = vmatprep.subr.mxu0 0.0
    %1434 = vmatpush1.msra.mxu0 0.0
    %1435 = vmatprep.subr.mxu0 0.0
    %1436 = vmatpush1.msra.mxu0 0.0
    %1437 = vmatprep.subr.mxu0 0.0
    %1438 = vmatpush1.msra.mxu0 0.0
    %1439 = vmatprep.subr.mxu0 0.0
    %1440 = vmatpush1.msra.mxu0 0.0
    %1441 = vmatprep.subr.mxu0 0.0
    %1442 = vmatpush1.msra.mxu0 0.0
    %1443 = vmatprep.subr.mxu0 0.0
    %1444 = vmatpush1.msra.mxu0 0.0
    %1445 = vmatprep.subr.mxu0 0.0
    %1446 = vmatpush1.msra.mxu0 0.0
    %1447 = vmatprep.subr.mxu0 0.0
    %1448 = vmatpush1.msra.mxu0 0.0
    %1449 = vmatprep.subr.mxu0 0.0
    %1450 = vmatpush1.msra.mxu0 0.0
    %1451 = vmatprep.subr.mxu0 0.0
    %1452 = vmatpush1.msra.mxu0 0.0
    %1453 = vmatprep.subr.mxu0 0.0
    %1454 = vmatpush1.msra.mxu0 0.0
    %1455 = vmatprep.subr.mxu0 0.0
    %1456 = vmatpush1.msra.mxu0 0.0
    %1457 = vmatprep.subr.mxu0 0.0
    %1458 = vmatpush1.msra.mxu0 0.0
    %1459 = vmatprep.subr.mxu0 0.0
    %1460 = vmatpush1.msra.mxu0 0.0
    %1461 = vmatprep.subr.mxu0 0.0
    %1462 = vmatpush1.msra.mxu0 0.0
    %1463 = vmatprep.subr.mxu0 0.0
    %1464 = vmatpush1.msra.mxu0 0.0
    %1465 = vmatprep.subr.mxu0 0.0
    %1466 = vmatpush1.msra.mxu0 0.0
    %1467 = vmatprep.subr.mxu0 0.0
    %1468 = vmatpush1.msra.mxu0 0.0
    %1469 = vmatprep.subr.mxu0 0.0
    %1470 = vmatpush1.msra.mxu0 0.0
    %1471 = vmatprep.subr.mxu0 0.0
    %1472 = vmatpush1.msra.mxu0 0.0
    %1473 = vmatprep.subr.mxu0 0.0
    %1474 = vmatpush1.msra.mxu0 0.0
    %1475 = vmatprep.subr.mxu0 0.0
    %1476 = vmatpush1.msra.mxu0 0.0
    %1477 = vmatprep.subr.mxu0 0.0
    %1478 = vmatpush1.msra.mxu0 0.0
    %1479 = vmatprep.subr.mxu0 0.0
    %1480 = vmatpush1.msra.mxu0 0.0
    %1481 = vmatprep.subr.mxu0 0.0
    %1482 = vmatpush1.msra.mxu0 0.0
    %1483 = vmatprep.mubr.f32.mxu0 0.0
    %1484 = vmatmul.mubr.f32.gmra.mrb[0].mxu0 %v1417
    %v1485 = vpop.f32.mrb[0].mxu0
    %v1486 = vadd.f32 0.0, %v1485
    %v1487 = vpop.f32.mrb[0].mxu0
    %1488 = vdwg.mxu0
    %v1489 = vadd.f32 %v1337, %v1486
    %v1490 = vxor.u32 %v1413, 2147483648
    %v1491 = vmul.f32 %v1490, 1.442695
    %v1492 = vpow.pop %v1491
    %v1493 = vadd.f32 %v1492, 1.0
    %v1494 = vrcp.pop %v1493
    %v1495 = vmul.f32 1.0, %v1494
    %v1496 = vtanh.pop %v1413
    %v1497 = vmul.f32 %v1495, %v1303
    %1499 = vrot.lane.b32.xlu0 %v1496, 64
    %v1500 = vpop.permute.xlu0 %1499
    %v1502 = vmul.f32 %v1495, %v1500
    %1504 = vrot.lane.b32.xlu0 %v1502, 32
    %v1505 = vpop.permute.xlu0 %1504
    %v1507 = vadd.f32 %v1497, %v1505
    %v1508 = vtanh.pop %v1507
    %1510 = vrot.lane.b32.xlu0 %v1508, 64
    %v1511 = vpop.permute.xlu0 %1510
    %v1513 = vmul.f32 %v1495, %v1511
    %v1514 = vmax.f32 %v1310, %v1513
    %v1515 = vxor.u32 %v1489, 2147483648
    %v1516 = vmul.f32 %v1515, 1.442695
    %v1517 = vpow.pop %v1516
    %v1518 = vadd.f32 %v1517, 1.0
    %v1519 = vrcp.pop %v1518
    %v1520 = vmul.f32 1.0, %v1519
    %v1521 = vtanh.pop %v1489
    %v1522 = vmul.f32 %v1520, %v1328
    %1524 = vrot.lane.b32.xlu0 %v1521, 64
    %v1525 = vpop.permute.xlu0 %1524
    %v1527 = vmul.f32 %v1520, %v1525
    %1529 = vrot.lane.b32.xlu0 %v1527, 32
    %v1530 = vpop.permute.xlu0 %1529
    %v1532 = vadd.f32 %v1522, %v1530
    %v1533 = vtanh.pop %v1532
    %1535 = vrot.lane.b32.xlu0 %v1533, 64
    %v1536 = vpop.permute.xlu0 %1535
    %v1538 = vmul.f32 %v1520, %v1536
    %v1539 = vmax.f32 %v1335, %v1538
    %v1540 = vld [vmem:[#allocation2 + $0x30] sm:$0xff]
    %v1541 = vld [vmem:[#allocation3 + $0x8] sm:$0xff]
    %1543 = vrot.lane.b32.xlu0 %v1513, 32
    %v1544 = vpop.permute.xlu0 %1543
    %v1545 = vsel %vm55, %v1544, 0
    %1547 = vmatprep.subr.mxu0 0.0
    %1548 = vmatpush1.msra.mxu0 %v319
    %1549 = vmatprep.subr.mxu0 0.0
    %1550 = vmatpush1.msra.mxu0 %v320
    %1551 = vmatprep.subr.mxu0 0.0
    %1552 = vmatpush1.msra.mxu0 %v321
    %1553 = vmatprep.subr.mxu0 0.0
    %1554 = vmatpush1.msra.mxu0 %v322
    %1555 = vmatprep.subr.mxu0 0.0
    %1556 = vmatpush1.msra.mxu0 0.0
    %1557 = vmatprep.subr.mxu0 0.0
    %1558 = vmatpush1.msra.mxu0 0.0
    %1559 = vmatprep.subr.mxu0 0.0
    %1560 = vmatpush1.msra.mxu0 0.0
    %1561 = vmatprep.subr.mxu0 0.0
    %1562 = vmatpush1.msra.mxu0 0.0
    %1563 = vmatprep.subr.mxu0 0.0
    %1564 = vmatpush1.msra.mxu0 0.0
    %1565 = vmatprep.subr.mxu0 0.0
    %1566 = vmatpush1.msra.mxu0 0.0
    %1567 = vmatprep.subr.mxu0 0.0
    %1568 = vmatpush1.msra.mxu0 0.0
    %1569 = vmatprep.subr.mxu0 0.0
    %1570 = vmatpush1.msra.mxu0 0.0
    %1571 = vmatprep.subr.mxu0 0.0
    %1572 = vmatpush1.msra.mxu0 0.0
    %1573 = vmatprep.subr.mxu0 0.0
    %1574 = vmatpush1.msra.mxu0 0.0
    %1575 = vmatprep.subr.mxu0 0.0
    %1576 = vmatpush1.msra.mxu0 0.0
    %1577 = vmatprep.subr.mxu0 0.0
    %1578 = vmatpush1.msra.mxu0 0.0
    %1579 = vmatprep.subr.mxu0 0.0
    %1580 = vmatpush1.msra.mxu0 0.0
    %1581 = vmatprep.subr.mxu0 0.0
    %1582 = vmatpush1.msra.mxu0 0.0
    %1583 = vmatprep.subr.mxu0 0.0
    %1584 = vmatpush1.msra.mxu0 0.0
    %1585 = vmatprep.subr.mxu0 0.0
    %1586 = vmatpush1.msra.mxu0 0.0
    %1587 = vmatprep.subr.mxu0 0.0
    %1588 = vmatpush1.msra.mxu0 0.0
    %1589 = vmatprep.subr.mxu0 0.0
    %1590 = vmatpush1.msra.mxu0 0.0
    %1591 = vmatprep.subr.mxu0 0.0
    %1592 = vmatpush1.msra.mxu0 0.0
    %1593 = vmatprep.subr.mxu0 0.0
    %1594 = vmatpush1.msra.mxu0 0.0
    %1595 = vmatprep.subr.mxu0 0.0
    %1596 = vmatpush1.msra.mxu0 0.0
    %1597 = vmatprep.subr.mxu0 0.0
    %1598 = vmatpush1.msra.mxu0 0.0
    %1599 = vmatprep.subr.mxu0 0.0
    %1600 = vmatpush1.msra.mxu0 0.0
    %1601 = vmatprep.subr.mxu0 0.0
    %1602 = vmatpush1.msra.mxu0 0.0
    %1603 = vmatprep.subr.mxu0 0.0
    %1604 = vmatpush1.msra.mxu0 0.0
    %1605 = vmatprep.subr.mxu0 0.0
    %1606 = vmatpush1.msra.mxu0 0.0
    %1607 = vmatprep.subr.mxu0 0.0
    %1608 = vmatpush1.msra.mxu0 0.0
    %1609 = vmatprep.subr.mxu0 0.0
    %1610 = vmatpush1.msra.mxu0 0.0
    %1611 = vmatprep.mubr.f32.mxu0 0.0
    %1612 = vmatmul.mubr.f32.gmra.mrb[0].mxu0 %v1545
    %v1613 = vpop.f32.mrb[0].mxu0
    %v1614 = vadd.f32 0.0, %v1613
    %v1615 = vpop.f32.mrb[0].mxu0
    %1616 = vdwg.mxu0
    %v1617 = vadd.f32 %v1540, %v1614
    %1619 = vrot.lane.b32.xlu0 %v1538, 32
    %v1620 = vpop.permute.xlu0 %1619
    %v1621 = vsel %vm55, %v1620, 0
    %1623 = vmatprep.subr.mxu0 0.0
    %1624 = vmatpush1.msra.mxu0 %v397
    %1625 = vmatprep.subr.mxu0 0.0
    %1626 = vmatpush1.msra.mxu0 %v398
    %1627 = vmatprep.subr.mxu0 0.0
    %1628 = vmatpush1.msra.mxu0 %v399
    %1629 = vmatprep.subr.mxu0 0.0
    %1630 = vmatpush1.msra.mxu0 %v400
    %1631 = vmatprep.subr.mxu0 0.0
    %1632 = vmatpush1.msra.mxu0 0.0
    %1633 = vmatprep.subr.mxu0 0.0
    %1634 = vmatpush1.msra.mxu0 0.0
    %1635 = vmatprep.subr.mxu0 0.0
    %1636 = vmatpush1.msra.mxu0 0.0
    %1637 = vmatprep.subr.mxu0 0.0
    %1638 = vmatpush1.msra.mxu0 0.0
    %1639 = vmatprep.subr.mxu0 0.0
    %1640 = vmatpush1.msra.mxu0 0.0
    %1641 = vmatprep.subr.mxu0 0.0
    %1642 = vmatpush1.msra.mxu0 0.0
    %1643 = vmatprep.subr.mxu0 0.0
    %1644 = vmatpush1.msra.mxu0 0.0
    %1645 = vmatprep.subr.mxu0 0.0
    %1646 = vmatpush1.msra.mxu0 0.0
    %1647 = vmatprep.subr.mxu0 0.0
    %1648 = vmatpush1.msra.mxu0 0.0
    %1649 = vmatprep.subr.mxu0 0.0
    %1650 = vmatpush1.msra.mxu0 0.0
    %1651 = vmatprep.subr.mxu0 0.0
    %1652 = vmatpush1.msra.mxu0 0.0
    %1653 = vmatprep.subr.mxu0 0.0
    %1654 = vmatpush1.msra.mxu0 0.0
    %1655 = vmatprep.subr.mxu0 0.0
    %1656 = vmatpush1.msra.mxu0 0.0
    %1657 = vmatprep.subr.mxu0 0.0
    %1658 = vmatpush1.msra.mxu0 0.0
    %1659 = vmatprep.subr.mxu0 0.0
    %1660 = vmatpush1.msra.mxu0 0.0
    %1661 = vmatprep.subr.mxu0 0.0
    %1662 = vmatpush1.msra.mxu0 0.0
    %1663 = vmatprep.subr.mxu0 0.0
    %1664 = vmatpush1.msra.mxu0 0.0
    %1665 = vmatprep.subr.mxu0 0.0
    %1666 = vmatpush1.msra.mxu0 0.0
    %1667 = vmatprep.subr.mxu0 0.0
    %1668 = vmatpush1.msra.mxu0 0.0
    %1669 = vmatprep.subr.mxu0 0.0
    %1670 = vmatpush1.msra.mxu0 0.0
    %1671 = vmatprep.subr.mxu0 0.0
    %1672 = vmatpush1.msra.mxu0 0.0
    %1673 = vmatprep.subr.mxu0 0.0
    %1674 = vmatpush1.msra.mxu0 0.0
    %1675 = vmatprep.subr.mxu0 0.0
    %1676 = vmatpush1.msra.mxu0 0.0
    %1677 = vmatprep.subr.mxu0 0.0
    %1678 = vmatpush1.msra.mxu0 0.0
    %1679 = vmatprep.subr.mxu0 0.0
    %1680 = vmatpush1.msra.mxu0 0.0
    %1681 = vmatprep.subr.mxu0 0.0
    %1682 = vmatpush1.msra.mxu0 0.0
    %1683 = vmatprep.subr.mxu0 0.0
    %1684 = vmatpush1.msra.mxu0 0.0
    %1685 = vmatprep.subr.mxu0 0.0
    %1686 = vmatpush1.msra.mxu0 0.0
    %1687 = vmatprep.mubr.f32.mxu0 0.0
    %1688 = vmatmul.mubr.f32.gmra.mrb[0].mxu0 %v1621
    %v1689 = vpop.f32.mrb[0].mxu0
    %v1690 = vadd.f32 0.0, %v1689
    %v1691 = vpop.f32.mrb[0].mxu0
    %1692 = vdwg.mxu0
    %v1693 = vadd.f32 %v1541, %v1690
    %v1694 = vxor.u32 %v1617, 2147483648
    %v1695 = vmul.f32 %v1694, 1.442695
    %v1696 = vpow.pop %v1695
    %v1697 = vadd.f32 %v1696, 1.0
    %v1698 = vrcp.pop %v1697
    %v1699 = vmul.f32 1.0, %v1698
    %v1700 = vtanh.pop %v1617
    %v1701 = vmul.f32 %v1699, %v1507
    %1703 = vrot.lane.b32.xlu0 %v1700, 64
    %v1704 = vpop.permute.xlu0 %1703
    %v1706 = vmul.f32 %v1699, %v1704
    %1708 = vrot.lane.b32.xlu0 %v1706, 32
    %v1709 = vpop.permute.xlu0 %1708
    %v1711 = vadd.f32 %v1701, %v1709
    %v1712 = vtanh.pop %v1711
    %1714 = vrot.lane.b32.xlu0 %v1712, 64
    %v1715 = vpop.permute.xlu0 %1714
    %v1717 = vmul.f32 %v1699, %v1715
    %v1718 = vmax.f32 %v1514, %v1717
    %v1719 = vxor.u32 %v1693, 2147483648
    %v1720 = vmul.f32 %v1719, 1.442695
    %v1721 = vpow.pop %v1720
    %v1722 = vadd.f32 %v1721, 1.0
    %v1723 = vrcp.pop %v1722
    %v1724 = vmul.f32 1.0, %v1723
    %v1725 = vtanh.pop %v1693
    %v1726 = vmul.f32 %v1724, %v1532
    %1728 = vrot.lane.b32.xlu0 %v1725, 64
    %v1729 = vpop.permute.xlu0 %1728
    %v1731 = vmul.f32 %v1724, %v1729
    %1733 = vrot.lane.b32.xlu0 %v1731, 32
    %v1734 = vpop.permute.xlu0 %1733
    %v1736 = vadd.f32 %v1726, %v1734
    %v1737 = vtanh.pop %v1736
    %1739 = vrot.lane.b32.xlu0 %v1737, 64
    %v1740 = vpop.permute.xlu0 %1739
    %v1742 = vmul.f32 %v1724, %v1740
    %v1743 = vmax.f32 %v1539, %v1742
    %v1744 = vld [vmem:[#allocation2 + $0x38] sm:$0xff]
    %v1745 = vld [vmem:[#allocation3] sm:$0xff]
    %1747 = vrot.lane.b32.xlu0 %v1717, 32
    %v1748 = vpop.permute.xlu0 %1747
    %v1749 = vsel %vm55, %v1748, 0
    %1751 = vmatprep.subr.mxu0 0.0
    %1752 = vmatpush1.msra.mxu0 %v319
    %1753 = vmatprep.subr.mxu0 0.0
    %1754 = vmatpush1.msra.mxu0 %v320
    %1755 = vmatprep.subr.mxu0 0.0
    %1756 = vmatpush1.msra.mxu0 %v321
    %1757 = vmatprep.subr.mxu0 0.0
    %1758 = vmatpush1.msra.mxu0 %v322
    %1759 = vmatprep.subr.mxu0 0.0
    %1760 = vmatpush1.msra.mxu0 0.0
    %1761 = vmatprep.subr.mxu0 0.0
    %1762 = vmatpush1.msra.mxu0 0.0
    %1763 = vmatprep.subr.mxu0 0.0
    %1764 = vmatpush1.msra.mxu0 0.0
    %1765 = vmatprep.subr.mxu0 0.0
    %1766 = vmatpush1.msra.mxu0 0.0
    %1767 = vmatprep.subr.mxu0 0.0
    %1768 = vmatpush1.msra.mxu0 0.0
    %1769 = vmatprep.subr.mxu0 0.0
    %1770 = vmatpush1.msra.mxu0 0.0
    %1771 = vmatprep.subr.mxu0 0.0
    %1772 = vmatpush1.msra.mxu0 0.0
    %1773 = vmatprep.subr.mxu0 0.0
    %1774 = vmatpush1.msra.mxu0 0.0
    %1775 = vmatprep.subr.mxu0 0.0
    %1776 = vmatpush1.msra.mxu0 0.0
    %1777 = vmatprep.subr.mxu0 0.0
    %1778 = vmatpush1.msra.mxu0 0.0
    %1779 = vmatprep.subr.mxu0 0.0
    %1780 = vmatpush1.msra.mxu0 0.0
    %1781 = vmatprep.subr.mxu0 0.0
    %1782 = vmatpush1.msra.mxu0 0.0
    %1783 = vmatprep.subr.mxu0 0.0
    %1784 = vmatpush1.msra.mxu0 0.0
    %1785 = vmatprep.subr.mxu0 0.0
    %1786 = vmatpush1.msra.mxu0 0.0
    %1787 = vmatprep.subr.mxu0 0.0
    %1788 = vmatpush1.msra.mxu0 0.0
    %1789 = vmatprep.subr.mxu0 0.0
    %1790 = vmatpush1.msra.mxu0 0.0
    %1791 = vmatprep.subr.mxu0 0.0
    %1792 = vmatpush1.msra.mxu0 0.0
    %1793 = vmatprep.subr.mxu0 0.0
    %1794 = vmatpush1.msra.mxu0 0.0
    %1795 = vmatprep.subr.mxu0 0.0
    %1796 = vmatpush1.msra.mxu0 0.0
    %1797 = vmatprep.subr.mxu0 0.0
    %1798 = vmatpush1.msra.mxu0 0.0
    %1799 = vmatprep.subr.mxu0 0.0
    %1800 = vmatpush1.msra.mxu0 0.0
    %1801 = vmatprep.subr.mxu0 0.0
    %1802 = vmatpush1.msra.mxu0 0.0
    %1803 = vmatprep.subr.mxu0 0.0
    %1804 = vmatpush1.msra.mxu0 0.0
    %1805 = vmatprep.subr.mxu0 0.0
    %1806 = vmatpush1.msra.mxu0 0.0
    %1807 = vmatprep.subr.mxu0 0.0
    %1808 = vmatpush1.msra.mxu0 0.0
    %1809 = vmatprep.subr.mxu0 0.0
    %1810 = vmatpush1.msra.mxu0 0.0
    %1811 = vmatprep.subr.mxu0 0.0
    %1812 = vmatpush1.msra.mxu0 0.0
    %1813 = vmatprep.subr.mxu0 0.0
    %1814 = vmatpush1.msra.mxu0 0.0
    %1815 = vmatprep.mubr.f32.mxu0 0.0
    %1816 = vmatmul.mubr.f32.gmra.mrb[0].mxu0 %v1749
    %v1817 = vpop.f32.mrb[0].mxu0
    %v1818 = vadd.f32 0.0, %v1817
    %v1819 = vpop.f32.mrb[0].mxu0
    %1820 = vdwg.mxu0
    %v1821 = vadd.f32 %v1744, %v1818
    %1823 = vrot.lane.b32.xlu0 %v1742, 32
    %v1824 = vpop.permute.xlu0 %1823
    %v1825 = vsel %vm55, %v1824, 0
    %1827 = vmatprep.subr.mxu0 0.0
    %1828 = vmatpush1.msra.mxu0 %v397
    %1829 = vmatprep.subr.mxu0 0.0
    %1830 = vmatpush1.msra.mxu0 %v398
    %1831 = vmatprep.subr.mxu0 0.0
    %1832 = vmatpush1.msra.mxu0 %v399
    %1833 = vmatprep.subr.mxu0 0.0
    %1834 = vmatpush1.msra.mxu0 %v400
    %1835 = vmatprep.subr.mxu0 0.0
    %1836 = vmatpush1.msra.mxu0 0.0
    %1837 = vmatprep.subr.mxu0 0.0
    %1838 = vmatpush1.msra.mxu0 0.0
    %1839 = vmatprep.subr.mxu0 0.0
    %1840 = vmatpush1.msra.mxu0 0.0
    %1841 = vmatprep.subr.mxu0 0.0
    %1842 = vmatpush1.msra.mxu0 0.0
    %1843 = vmatprep.subr.mxu0 0.0
    %1844 = vmatpush1.msra.mxu0 0.0
    %1845 = vmatprep.subr.mxu0 0.0
    %1846 = vmatpush1.msra.mxu0 0.0
    %1847 = vmatprep.subr.mxu0 0.0
    %1848 = vmatpush1.msra.mxu0 0.0
    %1849 = vmatprep.subr.mxu0 0.0
    %1850 = vmatpush1.msra.mxu0 0.0
    %1851 = vmatprep.subr.mxu0 0.0
    %1852 = vmatpush1.msra.mxu0 0.0
    %1853 = vmatprep.subr.mxu0 0.0
    %1854 = vmatpush1.msra.mxu0 0.0
    %1855 = vmatprep.subr.mxu0 0.0
    %1856 = vmatpush1.msra.mxu0 0.0
    %1857 = vmatprep.subr.mxu0 0.0
    %1858 = vmatpush1.msra.mxu0 0.0
    %1859 = vmatprep.subr.mxu0 0.0
    %1860 = vmatpush1.msra.mxu0 0.0
    %1861 = vmatprep.subr.mxu0 0.0
    %1862 = vmatpush1.msra.mxu0 0.0
    %1863 = vmatprep.subr.mxu0 0.0
    %1864 = vmatpush1.msra.mxu0 0.0
    %1865 = vmatprep.subr.mxu0 0.0
    %1866 = vmatpush1.msra.mxu0 0.0
    %1867 = vmatprep.subr.mxu0 0.0
    %1868 = vmatpush1.msra.mxu0 0.0
    %1869 = vmatprep.subr.mxu0 0.0
    %1870 = vmatpush1.msra.mxu0 0.0
    %1871 = vmatprep.subr.mxu0 0.0
    %1872 = vmatpush1.msra.mxu0 0.0
    %1873 = vmatprep.subr.mxu0 0.0
    %1874 = vmatpush1.msra.mxu0 0.0
    %1875 = vmatprep.subr.mxu0 0.0
    %1876 = vmatpush1.msra.mxu0 0.0
    %1877 = vmatprep.subr.mxu0 0.0
    %1878 = vmatpush1.msra.mxu0 0.0
    %1879 = vmatprep.subr.mxu0 0.0
    %1880 = vmatpush1.msra.mxu0 0.0
    %1881 = vmatprep.subr.mxu0 0.0
    %1882 = vmatpush1.msra.mxu0 0.0
    %1883 = vmatprep.subr.mxu0 0.0
    %1884 = vmatpush1.msra.mxu0 0.0
    %1885 = vmatprep.subr.mxu0 0.0
    %1886 = vmatpush1.msra.mxu0 0.0
    %1887 = vmatprep.subr.mxu0 0.0
    %1888 = vmatpush1.msra.mxu0 0.0
    %1889 = vmatprep.subr.mxu0 0.0
    %1890 = vmatpush1.msra.mxu0 0.0
    %1891 = vmatprep.mubr.f32.mxu0 0.0
    %1892 = vmatmul.mubr.f32.gmra.mrb[0].mxu0 %v1825
    %v1893 = vpop.f32.mrb[0].mxu0
    %v1894 = vadd.f32 0.0, %v1893
    %v1895 = vpop.f32.mrb[0].mxu0
    %1896 = vdwg.mxu0
    %v1897 = vadd.f32 %v1745, %v1894
    %v1898 = vxor.u32 %v1821, 2147483648
    %v1899 = vmul.f32 %v1898, 1.442695
    %v1900 = vpow.pop %v1899
    %v1901 = vadd.f32 %v1900, 1.0
    %v1902 = vrcp.pop %v1901
    %v1903 = vmul.f32 1.0, %v1902
    %v1904 = vtanh.pop %v1821
    %v1905 = vmul.f32 %v1903, %v1711
    %1907 = vrot.lane.b32.xlu0 %v1904, 64
    %v1908 = vpop.permute.xlu0 %1907
    %v1910 = vmul.f32 %v1903, %v1908
    %1912 = vrot.lane.b32.xlu0 %v1910, 32
    %v1913 = vpop.permute.xlu0 %1912
    %v1915 = vadd.f32 %v1905, %v1913
    %v1916 = vtanh.pop %v1915
    %1918 = vrot.lane.b32.xlu0 %v1916, 64
    %v1919 = vpop.permute.xlu0 %1918
    %v1921 = vmul.f32 %v1903, %v1919
    %v1922 = vmax.f32 %v1718, %v1921
    %v1923 = vxor.u32 %v1897, 2147483648
    %v1924 = vmul.f32 %v1923, 1.442695
    %v1925 = vpow.pop %v1924
    %v1926 = vadd.f32 %v1925, 1.0
    %v1927 = vrcp.pop %v1926
    %v1928 = vmul.f32 1.0, %v1927
    %v1929 = vtanh.pop %v1897
    %v1930 = vmul.f32 %v1928, %v1736
    %1932 = vrot.lane.b32.xlu0 %v1929, 64
    %v1933 = vpop.permute.xlu0 %1932
    %v1935 = vmul.f32 %v1928, %v1933
    %1937 = vrot.lane.b32.xlu0 %v1935, 32
    %v1938 = vpop.permute.xlu0 %1937
    %v1940 = vadd.f32 %v1930, %v1938
    %v1941 = vtanh.pop %v1940
    %1943 = vrot.lane.b32.xlu0 %v1941, 64
    %v1944 = vpop.permute.xlu0 %1943
    %v1946 = vmul.f32 %v1928, %v1944
    %v1947 = vmax.f32 %v1743, %v1946
    %1949 = vrot.lane.b32.xlu0 %v1922, 32
    %v1950 = vpop.permute.xlu0 %1949
    %vm1952 = vcmask 130048
    %1953 = vst.msk [vmem:[#allocation7] sm:$0xff] %vm1952, %v1950
    %1955 = vrot.lane.b32.xlu0 %v1947, 48
    %v1956 = vpop.permute.xlu0 %1955
    %vm1958 = vcmask 261248
    %1959 = vst.msk [vmem:[#allocation7] sm:$0xff] %vm1958, %v1956
    %1960 = vst.msk [vmem:[#allocation4] sm:$0xff] %vm1952, %v1950
    %1961 = vst.msk [vmem:[#allocation4] sm:$0xff] %vm1958, %v1956
    %1962 = vrot.lane.b32.xlu0 %v1922, 48
    %v1963 = vpop.permute.xlu0 %1962
    %vm1965 = vcmask 392448
    %1966 = vst.msk [vmem:[#allocation4] sm:$0xff] %vm1965, %v1963
    %1967 = vrot.lane.b32.xlu0 %v1947, 64
    %v1968 = vpop.permute.xlu0 %1967
    %vm1970 = vcmask 523648
    %1971 = vst.msk [vmem:[#allocation4] sm:$0xff] %vm1970, %v1968
    %v1972 = vld [vmem:[#allocation4] sm:$0xff]
    %v1973 = vld [vmem:[%s7] sm:$0xff]
    %v1974 = vld [vmem:[%s7 + $0x8] sm:$0xff]
    %v1975 = vld [vmem:[%s7 + $0x10] sm:$0xff]
    %v1976 = vld [vmem:[%s7 + $0x18] sm:$0xff]
    %v1977 = vld [vmem:[%s7 + $0x20] sm:$0xff]
    %v1978 = vld [vmem:[%s7 + $0x28] sm:$0xff]
    %v1979 = vld [vmem:[%s7 + $0x30] sm:$0xff]
    %v1980 = vld [vmem:[%s7 + $0x38] sm:$0xff]
    %v1981 = vld [vmem:[%s8] sm:$0x1]
    %v1983 = vlaneseq
    %v1984 = vshrl.u32 %v1983, 7
    %v1985 = vsub.s32 0, %v1984
    %v1986 = vrot.slane %v1981, %v1985
    %vm1988 = vcmask 523264
    %v1990 = vsel %vm1988, %v1972, 0
    %1992 = vmatprep.subr.mxu0 0.0
    %1993 = vmatpush1.msra.mxu0 %v1973
    %1994 = vmatprep.subr.mxu0 0.0
    %1995 = vmatpush1.msra.mxu0 %v1974
    %1996 = vmatprep.subr.mxu0 0.0
    %1997 = vmatpush1.msra.mxu0 %v1975
    %1998 = vmatprep.subr.mxu0 0.0
    %1999 = vmatpush1.msra.mxu0 %v1976
    %2000 = vmatprep.subr.mxu0 0.0
    %2001 = vmatpush1.msra.mxu0 %v1977
    %2002 = vmatprep.subr.mxu0 0.0
    %2003 = vmatpush1.msra.mxu0 %v1978
    %2004 = vmatprep.subr.mxu0 0.0
    %2005 = vmatpush1.msra.mxu0 %v1979
    %2006 = vmatprep.subr.mxu0 0.0
    %2007 = vmatpush1.msra.mxu0 %v1980
    %2008 = vmatprep.subr.mxu0 0.0
    %2009 = vmatpush1.msra.mxu0 0.0
    %2010 = vmatprep.subr.mxu0 0.0
    %2011 = vmatpush1.msra.mxu0 0.0
    %2012 = vmatprep.subr.mxu0 0.0
    %2013 = vmatpush1.msra.mxu0 0.0
    %2014 = vmatprep.subr.mxu0 0.0
    %2015 = vmatpush1.msra.mxu0 0.0
    %2016 = vmatprep.subr.mxu0 0.0
    %2017 = vmatpush1.msra.mxu0 0.0
    %2018 = vmatprep.subr.mxu0 0.0
    %2019 = vmatpush1.msra.mxu0 0.0
    %2020 = vmatprep.subr.mxu0 0.0
    %2021 = vmatpush1.msra.mxu0 0.0
    %2022 = vmatprep.subr.mxu0 0.0
    %2023 = vmatpush1.msra.mxu0 0.0
    %2024 = vmatprep.subr.mxu0 0.0
    %2025 = vmatpush1.msra.mxu0 0.0
    %2026 = vmatprep.subr.mxu0 0.0
    %2027 = vmatpush1.msra.mxu0 0.0
    %2028 = vmatprep.subr.mxu0 0.0
    %2029 = vmatpush1.msra.mxu0 0.0
    %2030 = vmatprep.subr.mxu0 0.0
    %2031 = vmatpush1.msra.mxu0 0.0
    %2032 = vmatprep.subr.mxu0 0.0
    %2033 = vmatpush1.msra.mxu0 0.0
    %2034 = vmatprep.subr.mxu0 0.0
    %2035 = vmatpush1.msra.mxu0 0.0
    %2036 = vmatprep.subr.mxu0 0.0
    %2037 = vmatpush1.msra.mxu0 0.0
    %2038 = vmatprep.subr.mxu0 0.0
    %2039 = vmatpush1.msra.mxu0 0.0
    %2040 = vmatprep.subr.mxu0 0.0
    %2041 = vmatpush1.msra.mxu0 0.0
    %2042 = vmatprep.subr.mxu0 0.0
    %2043 = vmatpush1.msra.mxu0 0.0
    %2044 = vmatprep.subr.mxu0 0.0
    %2045 = vmatpush1.msra.mxu0 0.0
    %2046 = vmatprep.subr.mxu0 0.0
    %2047 = vmatpush1.msra.mxu0 0.0
    %2048 = vmatprep.subr.mxu0 0.0
    %2049 = vmatpush1.msra.mxu0 0.0
    %2050 = vmatprep.subr.mxu0 0.0
    %2051 = vmatpush1.msra.mxu0 0.0
    %2052 = vmatprep.subr.mxu0 0.0
    %2053 = vmatpush1.msra.mxu0 0.0
    %2054 = vmatprep.subr.mxu0 0.0
    %2055 = vmatpush1.msra.mxu0 0.0
    %2056 = vmatprep.mubr.f32.mxu0 0.0
    %2057 = vmatmul.mubr.f32.gmra.mrb[0].mxu0 %v1990
    %v2058 = vpop.f32.mrb[0].mxu0
    %v2059 = vadd.f32 %v1986, %v2058
    %v2060 = vpop.f32.mrb[0].mxu0
    %2061 = vdwg.mxu0
    %vm2062 = vcmask 64512
    %2063 = vst.msk [vmem:[#allocation5] sm:$0xff] %vm2062, %v2059
    // Predicated region
    $region38: #{tpu_custom_call.1} parent=1 // pred_check
      _
    $region39: #{tpu_custom_call.1} parent=1 // pred_check_branch
      %2065 = sbr.rel (0) target = $region41
    $region40: #{tpu_custom_call.1} parent=1 // pred_region
      %s2067 = ssub.s32 128, 128
      %2068 = vsyncadd [#allocation6], %s2067
      %s2070 = sshll.u32 [#allocation5], 4
      %s2071 = int_to_ptr.vmem [resolvable:$true] %s2070
      %2073 = dma.vmem_to_hbm [thread:$0]  %s2071, 128, %s9, [#allocation6]
    $region41: #{tpu_custom_call.1} parent=1 // pred_fallthru
      _
    // Predicated region
    $region42: #{tpu_custom_call.1} parent=1 // pred_check
      _
    $region43: #{tpu_custom_call.1} parent=1 // pred_check_branch
      %2075 = sbr.rel (0) target = $region45
    $region44: #{tpu_custom_call.1} parent=1 // pred_region
      %s2077 = ssub.s32 128, 128
      %2078 = vsyncadd [#allocation8], %s2077
      %s2080 = sshll.u32 [#allocation7], 4
      %s2081 = int_to_ptr.vmem [resolvable:$true] %s2080
      %2083 = dma.vmem_to_hbm [thread:$0]  %s2081, 128, %s10, [#allocation8]
    $region45: #{tpu_custom_call.1} parent=1 // pred_fallthru
      _
    // Predicated region
    $region46: #{tpu_custom_call.1} parent=1 // pred_check
      _
    $region47: #{tpu_custom_call.1} parent=1 // pred_check_branch
      %2085 = sbr.rel (0) target = $region49
    $region48: #{tpu_custom_call.1} parent=1 // pred_region
      %2086 = dma.done [#allocation6], 128
    $region49: #{tpu_custom_call.1} parent=1 // pred_fallthru
      _
    // Predicated region
    $region50: #{tpu_custom_call.1} parent=1 // pred_check
      _
    $region51: #{tpu_custom_call.1} parent=1 // pred_check_branch
      %2088 = sbr.rel (0) target = $region53
    $region52: #{tpu_custom_call.1} parent=1 // pred_region
      %2089 = dma.done [#allocation8], 128
    $region53: #{tpu_custom_call.1} parent=1 // pred_fallthru
      _
    %2090 = vsyncpa [#allocation6], 1
    %2091 = vsyncpa [#allocation8], 1

</llo_original>
